<compile_context>
chip_gen: v5e
topology: v5e:2x2
jax: 0.10.0
libtpu: 0.0.40
codegen_flags: <defaults>
</compile_context>

<pallas_src>
import jax
import jax.numpy as jnp
from jax.experimental import pallas as pl
from jax.experimental.pallas import tpu as pltpu


def _round_up(v, m):
    return ((v + m - 1) // m) * m


# ---------------------------------------------------------------------------
# Fused kernel: per-meta-path GCN (grid over M) + semantic attention + head.
# ---------------------------------------------------------------------------
def make_fused_kernel(M, N):
    def kernel(a_ref, xw_ref, b1_ref, w2_ref, b2_ref,
               wp1_ref, bp1_ref, wp2t_ref, wpred_ref, bpred_ref,
               o_ref, z_sc, q_sc):
        m = pl.program_id(0)
        a = a_ref[...]                                      # (N, N) bf16 normalized adjacency

        # GraphConv #1: relu(A @ (X W1_m) + b1_m); X @ W1_m hoisted to the wrapper.
        h1 = jnp.dot(a, xw_ref[...], preferred_element_type=jnp.float32) + b1_ref[...]
        h1 = jnp.maximum(h1, 0.0)                           # (N, Hpad) f32

        # GraphConv #2: A @ (H1 W2_m) + b2_m (no activation).
        hw = jnp.dot(h1.astype(jnp.bfloat16), w2_ref[...],
                     preferred_element_type=jnp.float32)    # (N, Dp) f32
        z = jnp.dot(a, hw.astype(jnp.bfloat16),
                    preferred_element_type=jnp.float32) + b2_ref[...]
        z_bf16 = z.astype(jnp.bfloat16)                     # (N, Dp)

        # Stash Z_m (bf16, lane-dense Dp) in the persistent VMEM scratch.
        row = pl.multiple_of(m * N, N)
        z_sc[pl.ds(row, N), :] = z_bf16

        # Per-step semantic-attention projection (kept off the final-step critical
        # path): q_m = mean_n tanh(Z_m Wp1 + bp1). Stored broadcast over 8 sublanes
        # so the dynamic store stays sublane-aligned.
        p = jnp.tanh(jnp.dot(z_bf16, wp1_ref[...],
                             preferred_element_type=jnp.float32) + bp1_ref[...])
        q = jnp.mean(p, axis=0, keepdims=True)              # (1, Hp) f32
        qrow = pl.multiple_of(m * 8, 8)
        q_sc[pl.ds(qrow, 8), :] = jnp.broadcast_to(q, (8, q_sc.shape[1]))

        # Last meta-path: softmax over meta-paths + beta-weighted fuse + prediction.
        @pl.when(m == M - 1)
        def _():
            wp2t = wp2t_ref[...]                            # (1, Hp) f32
            # logit_m = q_m . wp2  (node-mean and wp2 projection commute).
            logits = [jnp.sum(q_sc[pl.ds(mm * 8, 1), :] * wp2t) for mm in range(M)]

            # Numerically stable softmax over the (static, tiny) meta-path axis.
            mx = logits[0]
            for w in logits[1:]:
                mx = jnp.maximum(mx, w)
            exps = [jnp.exp(w - mx) for w in logits]
            tot = exps[0]
            for e in exps[1:]:
                tot = tot + e
            inv_tot = 1.0 / tot                             # one divide, reused M times

            fused = (exps[0] * inv_tot) * z_sc[pl.ds(0, N), :].astype(jnp.float32)
            for mm in range(1, M):
                fused = fused + (exps[mm] * inv_tot) * z_sc[
                    pl.ds(mm * N, N), :].astype(jnp.float32)        # (N, Dp) f32

            # Lane-dense (padded-to-128) prediction head output.
            o_ref[...] = (
                jnp.dot(fused.astype(jnp.bfloat16), wpred_ref[...],
                        preferred_element_type=jnp.float32) + bpred_ref[...]
            )

    return kernel


def run_gcn_semantic(adjs_bf16, xw_bf16, b1, w2_bf16, b2,
                     wp1_bf16, bp1, wp2t, wpred_bf16, bpred):
    M, N, _ = adjs_bf16.shape
    H = xw_bf16.shape[2]          # padded GCN hidden dim
    Dp = w2_bf16.shape[2]         # padded embedding dim (lane-dense 128)
    Hp = wp1_bf16.shape[1]        # semantic-attention hidden dim
    Op = wpred_bf16.shape[1]      # padded output dim

    kernel = make_fused_kernel(M, N)

    # Advisory cost estimate (helps XLA schedule around the custom call).
    flops = int(M * (2 * N * N * H + 2 * N * H * Dp + 2 * N * N * Dp + 2 * N * Dp * Hp)
                + 2 * N * Dp * Op)
    transcendentals = int(M * N * Hp + M)
    bytes_accessed = int(
        adjs_bf16.size * 2 + xw_bf16.size * 2 + b1.size * 4 + w2_bf16.size * 2
        + b2.size * 4 + wp1_bf16.size * 2 + bp1.size * 4 + wp2t.size * 4
        + wpred_bf16.size * 2 + bpred.size * 4 + N * Op * 4)

    return pl.pallas_call(
        kernel,
        out_shape=jax.ShapeDtypeStruct((N, Op), jnp.float32),
        grid_spec=pltpu.PrefetchScalarGridSpec(
            num_scalar_prefetch=0,
            grid=(M,),
            in_specs=[
                # NOTE: full (N, N) adjacency block is fine for toy N; for real graphs,
                # row-tile A ((1, 256, N) on v6e/v7x, (1, 128, N) on v5e) on an extra
                # "parallel" grid axis and budget against v7x's 64 MiB VMEM.
                pl.BlockSpec((pl.Squeezed(), N, N), lambda m: (m, 0, 0)),   # A_m  (bf16)
                pl.BlockSpec((pl.Squeezed(), N, H), lambda m: (m, 0, 0)),   # X@W1_m (bf16)
                pl.BlockSpec((pl.Squeezed(), 1, H), lambda m: (m, 0, 0)),   # b1_m (f32)
                pl.BlockSpec((pl.Squeezed(), H, Dp), lambda m: (m, 0, 0)),  # W2_m (bf16)
                pl.BlockSpec((pl.Squeezed(), 1, Dp), lambda m: (m, 0, 0)),  # b2_m (f32)
                # Grid-invariant operands: single-buffered (no dead 2nd VMEM buffer).
                pl.BlockSpec((Dp, Hp), lambda m: (0, 0),
                             pipeline_mode=pl.Buffered(1)),                 # Wp1 (bf16)
                pl.BlockSpec((1, Hp), lambda m: (0, 0),
                             pipeline_mode=pl.Buffered(1)),                 # bp1 (f32)
                pl.BlockSpec((1, Hp), lambda m: (0, 0),
                             pipeline_mode=pl.Buffered(1)),                 # wp2^T (f32)
                pl.BlockSpec((Dp, Op), lambda m: (0, 0),
                             pipeline_mode=pl.Buffered(1)),                 # Wpred (bf16)
                pl.BlockSpec((1, Op), lambda m: (0, 0),
                             pipeline_mode=pl.Buffered(1)),                 # bpred (f32)
            ],
            out_specs=pl.BlockSpec((N, Op), lambda m: (0, 0)),
            scratch_shapes=[
                pltpu.VMEM((M * N, Dp), jnp.bfloat16),   # Z_m stash (bf16, lane-dense)
                pltpu.VMEM((M * 8, Hp), jnp.float32),    # per-meta-path attention means
            ],
        ),
        compiler_params=pltpu.CompilerParams(
            # M must be sequential: the epilogue needs every Z_m resident in this
            # core's VMEM scratch (fusion beats megacore M-parallelism at these sizes).
            dimension_semantics=("arbitrary",),
        ),
        cost_estimate=pl.CostEstimate(flops=flops,
                                      transcendentals=transcendentals,
                                      bytes_accessed=bytes_accessed),
    )(adjs_bf16, xw_bf16, b1, w2_bf16, b2, wp1_bf16, bp1, wp2t, wpred_bf16, bpred)


# ---------------------------------------------------------------------------
# Full forward: padding + per-meta-path X@W1_m hoist + bf16 casts in the wrapper,
# hot path in Pallas.
# ---------------------------------------------------------------------------
@jax.jit
def gcn_semantic_forward(adjs, x, params):
    H = params["w1"].shape[2]          # GCN hidden (1000)
    D = params["w2"].shape[2]          # embedding dim
    O = params["wpred"].shape[1]       # final out dim

    H_pad = _round_up(H, 128)              # 1000 -> 1024: lane-aligned K reduction
    D_pad = _round_up(max(D, 128), 128)    # lane-dense Z / scratch / head-K
    O_pad = _round_up(max(O, 128), 128)    # lane-dense output store, sliced back below

    # Zero-pad: pads stay exactly 0 through relu / the aggregations and contribute
    # nothing to downstream matmuls (padded weight rows are zero).
    w1p = jnp.pad(params["w1"], ((0, 0), (0, 0), (0, H_pad - H)))
    b1p = jnp.pad(params["b1"], ((0, 0), (0, 0), (0, H_pad - H)))
    w2p = jnp.pad(params["w2"], ((0, 0), (0, H_pad - H), (0, D_pad - D)))
    b2p = jnp.pad(params["b2"], ((0, 0), (0, 0), (0, D_pad - D)))
    wp1p = jnp.pad(params["wp1"], ((0, D_pad - D), (0, 0)))
    wpredp = jnp.pad(params["wpred"], ((0, D_pad - D), (0, O_pad - O)))
    bpredp = jnp.pad(params["bpred"], ((0, 0), (0, O_pad - O)))

    # Hoist the small-K feature projections X @ W1_m (stacked per meta-path, f32).
    xw = jnp.einsum("ni,mih->mnh", x, w1p)

    out_pad = run_gcn_semantic(
        adjs.astype(jnp.bfloat16),
        xw.astype(jnp.bfloat16),
        b1p,
        w2p.astype(jnp.bfloat16),
        b2p,
        wp1p.astype(jnp.bfloat16),
        params["bp1"],
        params["wp2"].T,                   # (1, Hp): kernel uses a lane-sum, no Hp->1 matmul
        wpredp.astype(jnp.bfloat16),
        bpredp,
    )
    return out_pad[:, :O]


def reference_forward(adjs, x, params):
    """Pure-JAX f32 reference for validation (per-meta-path GCN weights)."""
    zs = []
    for m in range(adjs.shape[0]):
        a = adjs[m]
        h1 = jax.nn.relu(a @ (x @ params["w1"][m]) + params["b1"][m, 0])
        zm = a @ (h1 @ params["w2"][m]) + params["b2"][m, 0]
        zs.append(zm)
    z = jnp.stack(zs, axis=0)                                              # (M, N, D)
    proj = jnp.tanh(z @ params["wp1"] + params["bp1"][0]) @ params["wp2"]  # (M, N, 1)
    w = proj.mean(axis=1)[:, 0]                                            # (M,)
    beta = jax.nn.softmax(w)
    fused = jnp.einsum("m,mnd->nd", beta, z)
    return fused @ params["wpred"] + params["bpred"][0]


if __name__ == "__main__":
    # Small shapes consistent with the module.
    M = 2            # num_meta_paths
    N = 32           # number of graph nodes
    IN_SIZE = 16     # input feature dim
    HID_GCN = 1000   # hardcoded GCN hidden size in MultiLayerGCN (padded to 1024)
    D = 32           # GCNSemantic hidden_size == MultiLayerGCN out_size
    HP = 128         # SemanticAttention hidden size
    OUT = 8          # final out_size
    # num_heads is an unused constructor arg in this forward path.

    key = jax.random.PRNGKey(0)
    keys = jax.random.split(key, 10)

    # Node features.
    x = jax.random.normal(keys[0], (N, IN_SIZE), dtype=jnp.float32) * 0.1

    # Synthetic symmetric adjacencies with self-loops, symmetric normalization
    # (matches DGL GraphConv norm='both' message passing).
    raw = (jax.random.uniform(keys[1], (M, N, N)) < 0.2).astype(jnp.float32)
    adj = jnp.clip(raw + jnp.transpose(raw, (0, 2, 1)) + jnp.eye(N)[None], 0.0, 1.0)
    deg = adj.sum(axis=-1)
    dinv = 1.0 / jnp.sqrt(deg)
    adjs = dinv[:, :, None] * adj * dinv[:, None, :]

    # Per-meta-path GCN weights (the torch module has one GCNLayer per meta-path).
    params = {
        "w1": jax.random.normal(keys[2], (M, IN_SIZE, HID_GCN), dtype=jnp.float32) * 0.05,
        "b1": jnp.full((M, 1, HID_GCN), 0.01, dtype=jnp.float32),
        "w2": jax.random.normal(keys[3], (M, HID_GCN, D), dtype=jnp.float32) * 0.05,
        "b2": jnp.full((M, 1, D), 0.01, dtype=jnp.float32),
        "wp1": jax.random.normal(keys[4], (D, HP), dtype=jnp.float32) * 0.05,
        "bp1": jnp.full((1, HP), 0.02, dtype=jnp.float32),
        "wp2": jax.random.normal(keys[5], (HP, 1), dtype=jnp.float32) * 0.05,
        "wpred": jax.random.normal(keys[6], (D, OUT), dtype=jnp.float32) * 0.05,
        "bpred": jnp.full((1, OUT), 0.03, dtype=jnp.float32),
    }

    out = gcn_semantic_forward(adjs, x, params)
    out = jax.block_until_ready(out)

    ref = reference_forward(adjs, x, params)
    assert out.shape == (N, OUT)
    assert jnp.all(jnp.isfinite(out))
    assert jnp.allclose(out, ref, rtol=1e-2, atol=1e-2), (
        f"mismatch: max abs err = {jnp.max(jnp.abs(out - ref))}"
    )

    print("KERNEL_OK")
</pallas_src>

<mosaic_0001>
module attributes {stable_mosaic.version = 11 : i64} {
  func.func @kernel(%arg0: i32, %arg1: memref<1x32x32xbf16, #tpu.memory_space<vmem>>, %arg2: memref<1x32x1024xbf16, #tpu.memory_space<vmem>>, %arg3: memref<1x1x1024xf32, #tpu.memory_space<vmem>>, %arg4: memref<1x1024x128xbf16, #tpu.memory_space<vmem>>, %arg5: memref<1x1x128xf32, #tpu.memory_space<vmem>>, %arg6: memref<128x128xbf16, #tpu.memory_space<vmem>>, %arg7: memref<1x128xf32, #tpu.memory_space<vmem>>, %arg8: memref<1x128xf32, #tpu.memory_space<vmem>>, %arg9: memref<128x128xbf16, #tpu.memory_space<vmem>>, %arg10: memref<1x128xf32, #tpu.memory_space<vmem>>, %arg11: memref<32x128xf32, #tpu.memory_space<vmem>>, %arg12: memref<64x128xbf16, #tpu.memory_space<vmem>>, %arg13: memref<16x128xf32, #tpu.memory_space<vmem>>) attributes {dimension_semantics = [#tpu.dimension_semantics<arbitrary>], iteration_bounds = array<i64: 2>, scalar_prefetch = 0 : i64, scratch_operands = 2 : i64, tpu.core_type = #tpu.core_type<tc>, window_params = [{transform_indices = @transform_0, window_bounds = array<i64: 1, 32, 32>}, {transform_indices = @transform_1, window_bounds = array<i64: 1, 32, 1024>}, {transform_indices = @transform_2, window_bounds = array<i64: 1, 1, 1024>}, {transform_indices = @transform_3, window_bounds = array<i64: 1, 1024, 128>}, {transform_indices = @transform_4, window_bounds = array<i64: 1, 1, 128>}, {pipeline_mode = #tpu.pipeline_mode<synchronous>, transform_indices = @transform_5, window_bounds = array<i64: 128, 128>}, {pipeline_mode = #tpu.pipeline_mode<synchronous>, transform_indices = @transform_6, window_bounds = array<i64: 1, 128>}, {pipeline_mode = #tpu.pipeline_mode<synchronous>, transform_indices = @transform_7, window_bounds = array<i64: 1, 128>}, {pipeline_mode = #tpu.pipeline_mode<synchronous>, transform_indices = @transform_8, window_bounds = array<i64: 128, 128>}, {pipeline_mode = #tpu.pipeline_mode<synchronous>, transform_indices = @transform_9, window_bounds = array<i64: 1, 128>}, {pipeline_mode = #tpu.pipeline_mode<synchronous>, transform_indices = @transform_10, window_bounds = array<i64: 32, 128>}]} {
    %c0 = arith.constant 0 : index
    %c0_0 = arith.constant 0 : index
    %c0_1 = arith.constant 0 : index
    %0 = vector.load %arg1[%c0, %c0_0, %c0_1] : memref<1x32x32xbf16, #tpu.memory_space<vmem>>, vector<1x32x32xbf16>
    %1 = vector.shape_cast %0 : vector<1x32x32xbf16> to vector<32x32xbf16>
    %c0_2 = arith.constant 0 : index
    %c0_3 = arith.constant 0 : index
    %c0_4 = arith.constant 0 : index
    %2 = vector.load %arg2[%c0_2, %c0_3, %c0_4] : memref<1x32x1024xbf16, #tpu.memory_space<vmem>>, vector<1x32x1024xbf16>
    %3 = vector.shape_cast %2 : vector<1x32x1024xbf16> to vector<32x1024xbf16>
    %cst = arith.constant dense<0.000000e+00> : vector<32x1024xf32>
    %4 = tpu.matmul %1, %3, %cst {dimension_numbers = #tpu.dot_dimension_numbers<[1], [0], [0], [1], [0, 0, 1, 1], [], []>} : vector<32x32xbf16>, vector<32x1024xbf16>, vector<32x1024xf32> -> vector<32x1024xf32>
    %c0_5 = arith.constant 0 : index
    %c0_6 = arith.constant 0 : index
    %c0_7 = arith.constant 0 : index
    %5 = vector.load %arg3[%c0_5, %c0_6, %c0_7] : memref<1x1x1024xf32, #tpu.memory_space<vmem>>, vector<1x1x1024xf32>
    %6 = vector.shape_cast %5 : vector<1x1x1024xf32> to vector<1x1024xf32>
    %7 = vector.broadcast %6 : vector<1x1024xf32> to vector<32x1024xf32>
    %8 = arith.addf %4, %7 : vector<32x1024xf32>
    %cst_8 = arith.constant 0.000000e+00 : f32
    %9 = vector.broadcast %cst_8 : f32 to vector<32x1024xf32>
    %10 = arith.maximumf %8, %9 : vector<32x1024xf32>
    %11 = arith.truncf %10 : vector<32x1024xf32> to vector<32x1024xbf16>
    %c0_9 = arith.constant 0 : index
    %c0_10 = arith.constant 0 : index
    %c0_11 = arith.constant 0 : index
    %12 = vector.load %arg4[%c0_9, %c0_10, %c0_11] : memref<1x1024x128xbf16, #tpu.memory_space<vmem>>, vector<1x1024x128xbf16>
    %13 = vector.shape_cast %12 : vector<1x1024x128xbf16> to vector<1024x128xbf16>
    %cst_12 = arith.constant dense<0.000000e+00> : vector<32x128xf32>
    %14 = tpu.matmul %11, %13, %cst_12 {dimension_numbers = #tpu.dot_dimension_numbers<[1], [0], [0], [1], [0, 0, 1, 1], [], []>} : vector<32x1024xbf16>, vector<1024x128xbf16>, vector<32x128xf32> -> vector<32x128xf32>
    %15 = arith.truncf %14 : vector<32x128xf32> to vector<32x128xbf16>
    %cst_13 = arith.constant dense<0.000000e+00> : vector<32x128xf32>
    %16 = tpu.matmul %1, %15, %cst_13 {dimension_numbers = #tpu.dot_dimension_numbers<[1], [0], [0], [1], [0, 0, 1, 1], [], []>} : vector<32x32xbf16>, vector<32x128xbf16>, vector<32x128xf32> -> vector<32x128xf32>
    %c0_14 = arith.constant 0 : index
    %c0_15 = arith.constant 0 : index
    %c0_16 = arith.constant 0 : index
    %17 = vector.load %arg5[%c0_14, %c0_15, %c0_16] : memref<1x1x128xf32, #tpu.memory_space<vmem>>, vector<1x1x128xf32>
    %18 = vector.shape_cast %17 : vector<1x1x128xf32> to vector<1x128xf32>
    %19 = vector.broadcast %18 : vector<1x128xf32> to vector<32x128xf32>
    %20 = arith.addf %16, %19 : vector<32x128xf32>
    %21 = arith.truncf %20 : vector<32x128xf32> to vector<32x128xbf16>
    %c32_i32 = arith.constant 32 : i32
    %22 = arith.muli %arg0, %c32_i32 : i32
    %23 = tpu.assume_multiple %22, 32 : i32
    %24 = arith.index_cast %23 : i32 to index
    %c0_17 = arith.constant 0 : index
    %25 = vector.load %arg12[%24, %c0_17] : memref<64x128xbf16, #tpu.memory_space<vmem>>, vector<32x128xbf16>
    tpu.vector_store %arg12[%24, %c0_17], %21 {strides = array<i32>} : memref<64x128xbf16, #tpu.memory_space<vmem>>, vector<32x128xbf16>,
    %c0_18 = arith.constant 0 : index
    %c0_19 = arith.constant 0 : index
    %26 = vector.load %arg6[%c0_18, %c0_19] : memref<128x128xbf16, #tpu.memory_space<vmem>>, vector<128x128xbf16>
    %cst_20 = arith.constant dense<0.000000e+00> : vector<32x128xf32>
    %27 = tpu.matmul %21, %26, %cst_20 {dimension_numbers = #tpu.dot_dimension_numbers<[1], [0], [0], [1], [0, 0, 1, 1], [], []>} : vector<32x128xbf16>, vector<128x128xbf16>, vector<32x128xf32> -> vector<32x128xf32>
    %c0_21 = arith.constant 0 : index
    %c0_22 = arith.constant 0 : index
    %28 = vector.load %arg7[%c0_21, %c0_22] : memref<1x128xf32, #tpu.memory_space<vmem>>, vector<1x128xf32>
    %29 = vector.broadcast %28 : vector<1x128xf32> to vector<32x128xf32>
    %30 = arith.addf %27, %29 : vector<32x128xf32>
    %31 = math.tanh %30 : vector<32x128xf32>
    %cst_23 = arith.constant dense<0.000000e+00> : vector<128xf32>
    %32 = vector.multi_reduction <add>, %31, %cst_23 [0] : vector<32x128xf32> to vector<128xf32>
    %33 = vector.shape_cast %32 : vector<128xf32> to vector<1x128xf32>
    %cst_24 = arith.constant 3.200000e+01 : f32
    %34 = vector.broadcast %cst_24 : f32 to vector<1x128xf32>
    %35 = arith.divf %33, %34 : vector<1x128xf32>
    %c8_i32 = arith.constant 8 : i32
    %36 = arith.muli %arg0, %c8_i32 : i32
    %37 = tpu.assume_multiple %36, 8 : i32
    %38 = vector.shape_cast %35 : vector<1x128xf32> to vector<1x128xf32>
    %39 = vector.broadcast %38 : vector<1x128xf32> to vector<8x128xf32>
    %40 = arith.index_cast %37 : i32 to index
    %c0_25 = arith.constant 0 : index
    %41 = vector.load %arg13[%40, %c0_25] : memref<16x128xf32, #tpu.memory_space<vmem>>, vector<8x128xf32>
    tpu.vector_store %arg13[%40, %c0_25], %39 {strides = array<i32>} : memref<16x128xf32, #tpu.memory_space<vmem>>, vector<8x128xf32>,
    %c1_i32 = arith.constant 1 : i32
    %42 = arith.cmpi eq, %arg0, %c1_i32 : i32
    %43 = arith.extui %42 : i1 to i32
    %c0_i32 = arith.constant 0 : i32
    %44 = arith.cmpi ne, %43, %c0_i32 : i32
    scf.if %44 {
      %c0_26 = arith.constant 0 : index
      %c0_27 = arith.constant 0 : index
      %45 = vector.load %arg8[%c0_26, %c0_27] : memref<1x128xf32, #tpu.memory_space<vmem>>, vector<1x128xf32>
      %c0_28 = arith.constant 0 : index
      %c0_29 = arith.constant 0 : index
      %46 = vector.load %arg13[%c0_28, %c0_29] : memref<16x128xf32, #tpu.memory_space<vmem>>, vector<1x128xf32>
      %47 = arith.mulf %46, %45 : vector<1x128xf32>
      %48 = vector.shape_cast %47 : vector<1x128xf32> to vector<1x1x128xf32>
      %cst_30 = arith.constant dense<0.000000e+00> : vector<1xf32>
      %49 = vector.multi_reduction <add>, %48, %cst_30 [1, 2] : vector<1x1x128xf32> to vector<1xf32>
      %50 = vector.shape_cast %49 : vector<1xf32> to vector<1x1x1xf32>
      %51 = vector.extract %50[0, 0, 0] : f32 from vector<1x1x1xf32>
      %c8 = arith.constant 8 : index
      %c0_31 = arith.constant 0 : index
      %52 = vector.load %arg13[%c8, %c0_31] : memref<16x128xf32, #tpu.memory_space<vmem>>, vector<1x128xf32>
      %53 = arith.mulf %52, %45 : vector<1x128xf32>
      %54 = vector.shape_cast %53 : vector<1x128xf32> to vector<1x1x128xf32>
      %cst_32 = arith.constant dense<0.000000e+00> : vector<1xf32>
      %55 = vector.multi_reduction <add>, %54, %cst_32 [1, 2] : vector<1x1x128xf32> to vector<1xf32>
      %56 = vector.shape_cast %55 : vector<1xf32> to vector<1x1x1xf32>
      %57 = vector.extract %56[0, 0, 0] : f32 from vector<1x1x1xf32>
      %58 = arith.maximumf %51, %57 : f32
      %59 = arith.subf %51, %58 : f32
      %60 = math.exp %59 : f32
      %61 = arith.subf %57, %58 : f32
      %62 = math.exp %61 : f32
      %63 = arith.addf %60, %62 : f32
      %cst_33 = arith.constant 1.000000e+00 : f32
      %64 = arith.divf %cst_33, %63 : f32
      %65 = arith.mulf %60, %64 : f32
      %c0_34 = arith.constant 0 : index
      %c0_35 = arith.constant 0 : index
      %66 = vector.load %arg12[%c0_34, %c0_35] : memref<64x128xbf16, #tpu.memory_space<vmem>>, vector<32x128xbf16>
      %67 = arith.extf %66 : vector<32x128xbf16> to vector<32x128xf32>
      %68 = vector.broadcast %65 : f32 to vector<32x128xf32>
      %69 = arith.mulf %68, %67 : vector<32x128xf32>
      %70 = arith.mulf %62, %64 : f32
      %c32 = arith.constant 32 : index
      %c0_36 = arith.constant 0 : index
      %71 = vector.load %arg12[%c32, %c0_36] : memref<64x128xbf16, #tpu.memory_space<vmem>>, vector<32x128xbf16>
      %72 = arith.extf %71 : vector<32x128xbf16> to vector<32x128xf32>
      %73 = vector.broadcast %70 : f32 to vector<32x128xf32>
      %74 = arith.mulf %73, %72 : vector<32x128xf32>
      %75 = arith.addf %69, %74 : vector<32x128xf32>
      %76 = arith.truncf %75 : vector<32x128xf32> to vector<32x128xbf16>
      %c0_37 = arith.constant 0 : index
      %c0_38 = arith.constant 0 : index
      %77 = vector.load %arg9[%c0_37, %c0_38] : memref<128x128xbf16, #tpu.memory_space<vmem>>, vector<128x128xbf16>
      %cst_39 = arith.constant dense<0.000000e+00> : vector<32x128xf32>
      %78 = tpu.matmul %76, %77, %cst_39 {dimension_numbers = #tpu.dot_dimension_numbers<[1], [0], [0], [1], [0, 0, 1, 1], [], []>} : vector<32x128xbf16>, vector<128x128xbf16>, vector<32x128xf32> -> vector<32x128xf32>
      %c0_40 = arith.constant 0 : index
      %c0_41 = arith.constant 0 : index
      %79 = vector.load %arg10[%c0_40, %c0_41] : memref<1x128xf32, #tpu.memory_space<vmem>>, vector<1x128xf32>
      %80 = vector.broadcast %79 : vector<1x128xf32> to vector<32x128xf32>
      %81 = arith.addf %78, %80 : vector<32x128xf32>
      %c0_42 = arith.constant 0 : index
      %c0_43 = arith.constant 0 : index
      %82 = vector.load %arg11[%c0_42, %c0_43] : memref<32x128xf32, #tpu.memory_space<vmem>>, vector<32x128xf32>
      tpu.vector_store %arg11[%c0_42, %c0_43], %81 {strides = array<i32>} : memref<32x128xf32, #tpu.memory_space<vmem>>, vector<32x128xf32>,
    } else {
    }
    return
  }
  func.func @transform_0(%arg0: i32) -> (i32, i32, i32) {
    %c0_i32 = arith.constant 0 : i32
    %c0_i32_0 = arith.constant 0 : i32
    %c0_i32_1 = arith.constant 0 : i32
    return %arg0, %c0_i32, %c0_i32_0 : i32, i32, i32
  }
  func.func @transform_1(%arg0: i32) -> (i32, i32, i32) {
    %c0_i32 = arith.constant 0 : i32
    %c0_i32_0 = arith.constant 0 : i32
    %c0_i32_1 = arith.constant 0 : i32
    return %arg0, %c0_i32, %c0_i32_0 : i32, i32, i32
  }
  func.func @transform_2(%arg0: i32) -> (i32, i32, i32) {
    %c0_i32 = arith.constant 0 : i32
    %c0_i32_0 = arith.constant 0 : i32
    %c0_i32_1 = arith.constant 0 : i32
    return %arg0, %c0_i32, %c0_i32_0 : i32, i32, i32
  }
  func.func @transform_3(%arg0: i32) -> (i32, i32, i32) {
    %c0_i32 = arith.constant 0 : i32
    %c0_i32_0 = arith.constant 0 : i32
    %c0_i32_1 = arith.constant 0 : i32
    return %arg0, %c0_i32, %c0_i32_0 : i32, i32, i32
  }
  func.func @transform_4(%arg0: i32) -> (i32, i32, i32) {
    %c0_i32 = arith.constant 0 : i32
    %c0_i32_0 = arith.constant 0 : i32
    %c0_i32_1 = arith.constant 0 : i32
    return %arg0, %c0_i32, %c0_i32_0 : i32, i32, i32
  }
  func.func @transform_5(%arg0: i32) -> (i32, i32) {
    %c0_i32 = arith.constant 0 : i32
    %c0_i32_0 = arith.constant 0 : i32
    %c0_i32_1 = arith.constant 0 : i32
    return %c0_i32, %c0_i32_0 : i32, i32
  }
  func.func @transform_6(%arg0: i32) -> (i32, i32) {
    %c0_i32 = arith.constant 0 : i32
    %c0_i32_0 = arith.constant 0 : i32
    %c0_i32_1 = arith.constant 0 : i32
    return %c0_i32, %c0_i32_0 : i32, i32
  }
  func.func @transform_7(%arg0: i32) -> (i32, i32) {
    %c0_i32 = arith.constant 0 : i32
    %c0_i32_0 = arith.constant 0 : i32
    %c0_i32_1 = arith.constant 0 : i32
    return %c0_i32, %c0_i32_0 : i32, i32
  }
  func.func @transform_8(%arg0: i32) -> (i32, i32) {
    %c0_i32 = arith.constant 0 : i32
    %c0_i32_0 = arith.constant 0 : i32
    %c0_i32_1 = arith.constant 0 : i32
    return %c0_i32, %c0_i32_0 : i32, i32
  }
  func.func @transform_9(%arg0: i32) -> (i32, i32) {
    %c0_i32 = arith.constant 0 : i32
    %c0_i32_0 = arith.constant 0 : i32
    %c0_i32_1 = arith.constant 0 : i32
    return %c0_i32, %c0_i32_0 : i32, i32
  }
  func.func @transform_10(%arg0: i32) -> (i32, i32) {
    %c0_i32 = arith.constant 0 : i32
    %c0_i32_0 = arith.constant 0 : i32
    %c0_i32_1 = arith.constant 0 : i32
    return %c0_i32, %c0_i32_0 : i32, i32
  }
}

</mosaic_0001>

<llo_original>
// kernel: gcn_semantic_forward.1
$region0: #{gcn_semantic_forward.1}
  #allocation0 [shape = 'u32[]', space=smem, size = 0x4, offset = 0x4, fixed_abs, tag = 'smem constant byte address 0x4 - core index']
  #allocation1 [shape = 'u32[72,128]{1,0:T(1,128)}', space=vmem, size = 0x9000, scoped, tag = 'internal scratch']
  #allocation2 [shape = 'bf16[64,128]{1,0:T(8,128)(2,1)}', space=vmem, size = 0x4000, scoped, tag = 'scratch operand']
  #allocation3 [shape = 'f32[16,128]{1,0:T(8,128)}', space=vmem, size = 0x2000, scoped, tag = 'scratch operand']
  %s0 = inlined_call_operand.vmem [shape: bf16[2,32,32], index: 0, kind: input, shape index: {}]
  %s1 = inlined_call_operand.vmem [shape: bf16[2,32,1024], index: 1, kind: input, shape index: {}]
  %s2 = inlined_call_operand.vmem [shape: f32[2,1,1024], index: 2, kind: input, shape index: {}]
  %s3 = inlined_call_operand.vmem [shape: bf16[2,1024,128], index: 3, kind: input, shape index: {}]
  %s4 = inlined_call_operand.vmem [shape: f32[2,1,128], index: 4, kind: input, shape index: {}]
  %s5 = inlined_call_operand.vmem [shape: bf16[128,128], index: 5, kind: input, shape index: {}]
  %s6 = inlined_call_operand.vmem [shape: f32[1,128], index: 6, kind: input, shape index: {}]
  %s7 = inlined_call_operand.vmem [shape: f32[1,128], index: 7, kind: input, shape index: {}]
  %s8 = inlined_call_operand.vmem [shape: bf16[128,128], index: 8, kind: input, shape index: {}]
  %s9 = inlined_call_operand.vmem [shape: f32[1,128], index: 9, kind: input, shape index: {}]
  %s10 = inlined_call_operand.vmem [shape: f32[32,128], index: 10, kind: output, shape index: {}]
  %s11 = sld [smem:[#allocation0]]
  $region77: #{gcn_semantic_forward.1} parent=0
    _
  %s13 = ssub.s32 1, %s11
  %s14 = scalar_select 0, %s13, %s11
  loop: start=0, step=1, limit=4
  $region2: #{gcn_semantic_forward.1} parent=0 // loop_pre_header
    _
  $region3: #{gcn_semantic_forward.1} parent=0 // loop_header
    %s16 = sphi 0, %s20
    %p17 = scmp.ge.s32.totalorder %s16, 4
    %s26 = sphi 0, %s28
    %s29 = sphi 0, %s26
    %s30 = sphi 0, %s29
    %s46 = sphi 0, %s30
    %s52 = sphi 0, %s54
    %s55 = sphi 0, %s52
    %s56 = sphi 0, %s55
    %s72 = sphi 0, %s56
    %s78 = sphi 0, %s80
    %s81 = sphi 0, %s78
    %s82 = sphi 0, %s81
    %s98 = sphi 0, %s82
    %s104 = sphi 0, %s106
    %s107 = sphi 0, %s104
    %s108 = sphi 0, %s107
    %s124 = sphi 0, %s108
    %s130 = sphi 0, %s132
    %s133 = sphi 0, %s130
    %s134 = sphi 0, %s133
    %s150 = sphi 0, %s134
    %s154 = sphi 0, %s154
    %s156 = sphi 0, %s154
    %s157 = sphi 0, %s156
    %s171 = sphi 0, %s157
    %s175 = sphi 0, %s175
    %s177 = sphi 0, %s175
    %s178 = sphi 0, %s177
    %s192 = sphi 0, %s178
    %s196 = sphi 0, %s196
    %s198 = sphi 0, %s196
    %s199 = sphi 0, %s198
    %s213 = sphi 0, %s199
    %s217 = sphi 0, %s217
    %s219 = sphi 0, %s217
    %s220 = sphi 0, %s219
    %s234 = sphi 0, %s220
    %s238 = sphi 0, %s238
    %s240 = sphi 0, %s238
    %s241 = sphi 0, %s240
    %s255 = sphi 0, %s241
    %s259 = sphi 0, %s259
    %s261 = sphi 0, %s259
    %s262 = sphi 0, %s261
    %s276 = sphi 0, %s262
  $region4: #{gcn_semantic_forward.1} parent=0 // loop_header_branch
    %19 = sbr.rel (%p17) target = $region8
  $region5: #{gcn_semantic_forward.1} parent=0 // loop_body
    %s21 = ssub.s32 %s16, 1
    %s22 = ssub.s32 %s16, 2
    %s23 = sadd.s32 %s16, 1
    %s24 = ssub.s32 %s16, %s23
    %p25 = scmp.eq.s32.totalorder %s24, 0
    %s27 = sadd.s32 %s26, 1
    %s28 = scalar_select %p25, %s26, %s27
    %p31 = pneg %p25
    %p32 = scmp.eq.s32.totalorder %s16, 1
    %p33 = por %p31, %p32
    %p34 = scmp.ne.s32.totalorder %s26, %s29
    %p35 = scmp.eq.s32.totalorder %s16, 0
    %p36 = por %p34, %p35
    %p37 = scmp.ne.s32.totalorder %s26, %s29
    %p38 = scmp.eq.s32.totalorder %s21, 1
    %p39 = por %p37, %p38
    %p40 = scmp.ne.s32.totalorder %s29, %s30
    %p41 = scmp.eq.s32.totalorder %s21, 0
    %p42 = por %p40, %p41
    %p43 = scmp.ne.s32.totalorder %s29, %s30
    %p44 = scmp.eq.s32.totalorder %s22, 1
    %p45 = por %p43, %p44
    %p47 = scmp.ne.s32.totalorder %s30, %s46
    %p48 = scmp.eq.s32.totalorder %s22, 0
    %p49 = por %p47, %p48
    %s50 = ssub.s32 %s16, %s23
    %p51 = scmp.eq.s32.totalorder %s50, 0
    %s53 = sadd.s32 %s52, 1
    %s54 = scalar_select %p51, %s52, %s53
    %p57 = pneg %p51
    %p58 = scmp.eq.s32.totalorder %s16, 1
    %p59 = por %p57, %p58
    %p60 = scmp.ne.s32.totalorder %s52, %s55
    %p61 = scmp.eq.s32.totalorder %s16, 0
    %p62 = por %p60, %p61
    %p63 = scmp.ne.s32.totalorder %s52, %s55
    %p64 = scmp.eq.s32.totalorder %s21, 1
    %p65 = por %p63, %p64
    %p66 = scmp.ne.s32.totalorder %s55, %s56
    %p67 = scmp.eq.s32.totalorder %s21, 0
    %p68 = por %p66, %p67
    %p69 = scmp.ne.s32.totalorder %s55, %s56
    %p70 = scmp.eq.s32.totalorder %s22, 1
    %p71 = por %p69, %p70
    %p73 = scmp.ne.s32.totalorder %s56, %s72
    %p74 = scmp.eq.s32.totalorder %s22, 0
    %p75 = por %p73, %p74
    %s76 = ssub.s32 %s16, %s23
    %p77 = scmp.eq.s32.totalorder %s76, 0
    %s79 = sadd.s32 %s78, 1
    %s80 = scalar_select %p77, %s78, %s79
    %p83 = pneg %p77
    %p84 = scmp.eq.s32.totalorder %s16, 1
    %p85 = por %p83, %p84
    %p86 = scmp.ne.s32.totalorder %s78, %s81
    %p87 = scmp.eq.s32.totalorder %s16, 0
    %p88 = por %p86, %p87
    %p89 = scmp.ne.s32.totalorder %s78, %s81
    %p90 = scmp.eq.s32.totalorder %s21, 1
    %p91 = por %p89, %p90
    %p92 = scmp.ne.s32.totalorder %s81, %s82
    %p93 = scmp.eq.s32.totalorder %s21, 0
    %p94 = por %p92, %p93
    %p95 = scmp.ne.s32.totalorder %s81, %s82
    %p96 = scmp.eq.s32.totalorder %s22, 1
    %p97 = por %p95, %p96
    %p99 = scmp.ne.s32.totalorder %s82, %s98
    %p100 = scmp.eq.s32.totalorder %s22, 0
    %p101 = por %p99, %p100
    %s102 = ssub.s32 %s16, %s23
    %p103 = scmp.eq.s32.totalorder %s102, 0
    %s105 = sadd.s32 %s104, 1
    %s106 = scalar_select %p103, %s104, %s105
    %p109 = pneg %p103
    %p110 = scmp.eq.s32.totalorder %s16, 1
    %p111 = por %p109, %p110
    %p112 = scmp.ne.s32.totalorder %s104, %s107
    %p113 = scmp.eq.s32.totalorder %s16, 0
    %p114 = por %p112, %p113
    %p115 = scmp.ne.s32.totalorder %s104, %s107
    %p116 = scmp.eq.s32.totalorder %s21, 1
    %p117 = por %p115, %p116
    %p118 = scmp.ne.s32.totalorder %s107, %s108
    %p119 = scmp.eq.s32.totalorder %s21, 0
    %p120 = por %p118, %p119
    %p121 = scmp.ne.s32.totalorder %s107, %s108
    %p122 = scmp.eq.s32.totalorder %s22, 1
    %p123 = por %p121, %p122
    %p125 = scmp.ne.s32.totalorder %s108, %s124
    %p126 = scmp.eq.s32.totalorder %s22, 0
    %p127 = por %p125, %p126
    %s128 = ssub.s32 %s16, %s23
    %p129 = scmp.eq.s32.totalorder %s128, 0
    %s131 = sadd.s32 %s130, 1
    %s132 = scalar_select %p129, %s130, %s131
    %p135 = pneg %p129
    %p136 = scmp.eq.s32.totalorder %s16, 1
    %p137 = por %p135, %p136
    %p138 = scmp.ne.s32.totalorder %s130, %s133
    %p139 = scmp.eq.s32.totalorder %s16, 0
    %p140 = por %p138, %p139
    %p141 = scmp.ne.s32.totalorder %s130, %s133
    %p142 = scmp.eq.s32.totalorder %s21, 1
    %p143 = por %p141, %p142
    %p144 = scmp.ne.s32.totalorder %s133, %s134
    %p145 = scmp.eq.s32.totalorder %s21, 0
    %p146 = por %p144, %p145
    %p147 = scmp.ne.s32.totalorder %s133, %s134
    %p148 = scmp.eq.s32.totalorder %s22, 1
    %p149 = por %p147, %p148
    %p151 = scmp.ne.s32.totalorder %s134, %s150
    %p152 = scmp.eq.s32.totalorder %s22, 0
    %p153 = por %p151, %p152
    %s155 = sadd.s32 %s154, 1
    %p158 = scmp.eq.s32.totalorder %s16, 1
    %p159 = scmp.ne.s32.totalorder %s154, %s156
    %p160 = scmp.eq.s32.totalorder %s16, 0
    %p161 = por %p159, %p160
    %p162 = scmp.ne.s32.totalorder %s154, %s156
    %p163 = scmp.eq.s32.totalorder %s21, 1
    %p164 = por %p162, %p163
    %p165 = scmp.ne.s32.totalorder %s156, %s157
    %p166 = scmp.eq.s32.totalorder %s21, 0
    %p167 = por %p165, %p166
    %p168 = scmp.ne.s32.totalorder %s156, %s157
    %p169 = scmp.eq.s32.totalorder %s22, 1
    %p170 = por %p168, %p169
    %p172 = scmp.ne.s32.totalorder %s157, %s171
    %p173 = scmp.eq.s32.totalorder %s22, 0
    %p174 = por %p172, %p173
    %s176 = sadd.s32 %s175, 1
    %p179 = scmp.eq.s32.totalorder %s16, 1
    %p180 = scmp.ne.s32.totalorder %s175, %s177
    %p181 = scmp.eq.s32.totalorder %s16, 0
    %p182 = por %p180, %p181
    %p183 = scmp.ne.s32.totalorder %s175, %s177
    %p184 = scmp.eq.s32.totalorder %s21, 1
    %p185 = por %p183, %p184
    %p186 = scmp.ne.s32.totalorder %s177, %s178
    %p187 = scmp.eq.s32.totalorder %s21, 0
    %p188 = por %p186, %p187
    %p189 = scmp.ne.s32.totalorder %s177, %s178
    %p190 = scmp.eq.s32.totalorder %s22, 1
    %p191 = por %p189, %p190
    %p193 = scmp.ne.s32.totalorder %s178, %s192
    %p194 = scmp.eq.s32.totalorder %s22, 0
    %p195 = por %p193, %p194
    %s197 = sadd.s32 %s196, 1
    %p200 = scmp.eq.s32.totalorder %s16, 1
    %p201 = scmp.ne.s32.totalorder %s196, %s198
    %p202 = scmp.eq.s32.totalorder %s16, 0
    %p203 = por %p201, %p202
    %p204 = scmp.ne.s32.totalorder %s196, %s198
    %p205 = scmp.eq.s32.totalorder %s21, 1
    %p206 = por %p204, %p205
    %p207 = scmp.ne.s32.totalorder %s198, %s199
    %p208 = scmp.eq.s32.totalorder %s21, 0
    %p209 = por %p207, %p208
    %p210 = scmp.ne.s32.totalorder %s198, %s199
    %p211 = scmp.eq.s32.totalorder %s22, 1
    %p212 = por %p210, %p211
    %p214 = scmp.ne.s32.totalorder %s199, %s213
    %p215 = scmp.eq.s32.totalorder %s22, 0
    %p216 = por %p214, %p215
    %s218 = sadd.s32 %s217, 1
    %p221 = scmp.eq.s32.totalorder %s16, 1
    %p222 = scmp.ne.s32.totalorder %s217, %s219
    %p223 = scmp.eq.s32.totalorder %s16, 0
    %p224 = por %p222, %p223
    %p225 = scmp.ne.s32.totalorder %s217, %s219
    %p226 = scmp.eq.s32.totalorder %s21, 1
    %p227 = por %p225, %p226
    %p228 = scmp.ne.s32.totalorder %s219, %s220
    %p229 = scmp.eq.s32.totalorder %s21, 0
    %p230 = por %p228, %p229
    %p231 = scmp.ne.s32.totalorder %s219, %s220
    %p232 = scmp.eq.s32.totalorder %s22, 1
    %p233 = por %p231, %p232
    %p235 = scmp.ne.s32.totalorder %s220, %s234
    %p236 = scmp.eq.s32.totalorder %s22, 0
    %p237 = por %p235, %p236
    %s239 = sadd.s32 %s238, 1
    %p242 = scmp.eq.s32.totalorder %s16, 1
    %p243 = scmp.ne.s32.totalorder %s238, %s240
    %p244 = scmp.eq.s32.totalorder %s16, 0
    %p245 = por %p243, %p244
    %p246 = scmp.ne.s32.totalorder %s238, %s240
    %p247 = scmp.eq.s32.totalorder %s21, 1
    %p248 = por %p246, %p247
    %p249 = scmp.ne.s32.totalorder %s240, %s241
    %p250 = scmp.eq.s32.totalorder %s21, 0
    %p251 = por %p249, %p250
    %p252 = scmp.ne.s32.totalorder %s240, %s241
    %p253 = scmp.eq.s32.totalorder %s22, 1
    %p254 = por %p252, %p253
    %p256 = scmp.ne.s32.totalorder %s241, %s255
    %p257 = scmp.eq.s32.totalorder %s22, 0
    %p258 = por %p256, %p257
    %s260 = sadd.s32 %s259, 1
    %p263 = scmp.eq.s32.totalorder %s16, 1
    %p264 = scmp.ne.s32.totalorder %s259, %s261
    %p265 = scmp.eq.s32.totalorder %s16, 0
    %p266 = por %p264, %p265
    %p267 = scmp.ne.s32.totalorder %s259, %s261
    %p268 = scmp.eq.s32.totalorder %s21, 1
    %p269 = por %p267, %p268
    %p270 = scmp.ne.s32.totalorder %s261, %s262
    %p271 = scmp.eq.s32.totalorder %s21, 0
    %p272 = por %p270, %p271
    %p273 = scmp.ne.s32.totalorder %s261, %s262
    %p274 = scmp.eq.s32.totalorder %s22, 1
    %p275 = por %p273, %p274
    %p277 = scmp.ne.s32.totalorder %s262, %s276
    %p278 = scmp.eq.s32.totalorder %s22, 0
    %p279 = por %p277, %p278
    %p280 = scmp.le.s32.totalorder 1, %s16
    %p281 = scmp.lt.s32.totalorder %s16, 3
    %p282 = pnand %p280, %p281
    %p283 = pneg %p282
    // Predicated region
    $region9: #{gcn_semantic_forward.1} parent=5 // pred_check
      _
    $region10: #{gcn_semantic_forward.1} parent=5 // pred_check_branch
      %285 = sbr.rel (%p282) target = $region12
    $region11: #{gcn_semantic_forward.1} parent=5 // pred_region
      %s286 = ssub.s32 %s16, 1
      // Predicated region
      $region13: #{gcn_semantic_forward.1} parent=11 // pred_check
        %p287 = pneg %p167
      $region14: #{gcn_semantic_forward.1} parent=11 // pred_check_branch
        %289 = sbr.rel (%p287) target = $region16
      $region15: #{gcn_semantic_forward.1} parent=11 // pred_region
        _
      $region16: #{gcn_semantic_forward.1} parent=11 // pred_fallthru
        _
      // Predicated region
      $region17: #{gcn_semantic_forward.1} parent=11 // pred_check
        %p290 = pneg %p188
      $region18: #{gcn_semantic_forward.1} parent=11 // pred_check_branch
        %292 = sbr.rel (%p290) target = $region20
      $region19: #{gcn_semantic_forward.1} parent=11 // pred_region
        _
      $region20: #{gcn_semantic_forward.1} parent=11 // pred_fallthru
        _
      // Predicated region
      $region21: #{gcn_semantic_forward.1} parent=11 // pred_check
        %p293 = pneg %p209
      $region22: #{gcn_semantic_forward.1} parent=11 // pred_check_branch
        %295 = sbr.rel (%p293) target = $region24
      $region23: #{gcn_semantic_forward.1} parent=11 // pred_region
        _
      $region24: #{gcn_semantic_forward.1} parent=11 // pred_fallthru
        _
      // Predicated region
      $region25: #{gcn_semantic_forward.1} parent=11 // pred_check
        %p296 = pneg %p230
      $region26: #{gcn_semantic_forward.1} parent=11 // pred_check_branch
        %298 = sbr.rel (%p296) target = $region28
      $region27: #{gcn_semantic_forward.1} parent=11 // pred_region
        _
      $region28: #{gcn_semantic_forward.1} parent=11 // pred_fallthru
        _
      // Predicated region
      $region29: #{gcn_semantic_forward.1} parent=11 // pred_check
        %p299 = pneg %p251
      $region30: #{gcn_semantic_forward.1} parent=11 // pred_check_branch
        %301 = sbr.rel (%p299) target = $region32
      $region31: #{gcn_semantic_forward.1} parent=11 // pred_region
        _
      $region32: #{gcn_semantic_forward.1} parent=11 // pred_fallthru
        _
    $region12: #{gcn_semantic_forward.1} parent=5 // pred_fallthru
      _
    %p302 = scmp.lt.s32.totalorder %s16, 2
    // Predicated region
    $region33: #{gcn_semantic_forward.1} parent=5 // pred_check
      %p303 = pneg %p302
    $region34: #{gcn_semantic_forward.1} parent=5 // pred_check_branch
      %305 = sbr.rel (%p303) target = $region36
    $region35: #{gcn_semantic_forward.1} parent=5 // pred_region
      // Predicated region
      $region37: #{gcn_semantic_forward.1} parent=35 // pred_check
        %p306 = pneg %p36
      $region38: #{gcn_semantic_forward.1} parent=35 // pred_check_branch
        %308 = sbr.rel (%p306) target = $region40
      $region39: #{gcn_semantic_forward.1} parent=35 // pred_region
        %p309 = scmp.lt.s32.totalorder %s16, 1
        %s310 = scalar_select %p309, %s16, 1
        %s311 = smul.addr %s310, 4
        %s312 = smul.addr %s311, 4
        %s313 = scalar_lea.vmem %s0, %s312
      $region40: #{gcn_semantic_forward.1} parent=35 // pred_fallthru
        _
      // Predicated region
      $region41: #{gcn_semantic_forward.1} parent=35 // pred_check
        %p314 = pneg %p62
      $region42: #{gcn_semantic_forward.1} parent=35 // pred_check_branch
        %316 = sbr.rel (%p314) target = $region44
      $region43: #{gcn_semantic_forward.1} parent=35 // pred_region
        %p317 = scmp.lt.s32.totalorder %s16, 1
        %s318 = scalar_select %p317, %s16, 1
        %s319 = smul.addr %s318, 32
        %s320 = smul.addr %s319, 4
        %s321 = scalar_lea.vmem %s1, %s320
      $region44: #{gcn_semantic_forward.1} parent=35 // pred_fallthru
        _
      // Predicated region
      $region45: #{gcn_semantic_forward.1} parent=35 // pred_check
        %p322 = pneg %p88
      $region46: #{gcn_semantic_forward.1} parent=35 // pred_check_branch
        %324 = sbr.rel (%p322) target = $region48
      $region47: #{gcn_semantic_forward.1} parent=35 // pred_region
        %p325 = scmp.lt.s32.totalorder %s16, 1
        %s326 = scalar_select %p325, %s16, 1
        %s327 = smul.addr %s326, 8
        %s328 = scalar_lea.vmem %s2, %s327
      $region48: #{gcn_semantic_forward.1} parent=35 // pred_fallthru
        _
      // Predicated region
      $region49: #{gcn_semantic_forward.1} parent=35 // pred_check
        %p329 = pneg %p114
      $region50: #{gcn_semantic_forward.1} parent=35 // pred_check_branch
        %331 = sbr.rel (%p329) target = $region52
      $region51: #{gcn_semantic_forward.1} parent=35 // pred_region
        %p332 = scmp.lt.s32.totalorder %s16, 1
        %s333 = scalar_select %p332, %s16, 1
        %s334 = smul.addr %s333, 128
        %s335 = smul.addr %s334, 4
        %s336 = scalar_lea.vmem %s3, %s335
      $region52: #{gcn_semantic_forward.1} parent=35 // pred_fallthru
        _
      // Predicated region
      $region53: #{gcn_semantic_forward.1} parent=35 // pred_check
        %p337 = pneg %p140
      $region54: #{gcn_semantic_forward.1} parent=35 // pred_check_branch
        %339 = sbr.rel (%p337) target = $region56
      $region55: #{gcn_semantic_forward.1} parent=35 // pred_region
        %p340 = scmp.lt.s32.totalorder %s16, 1
        %s341 = scalar_select %p340, %s16, 1
        %s342 = scalar_lea.vmem %s4, %s341
      $region56: #{gcn_semantic_forward.1} parent=35 // pred_fallthru
        _
    $region36: #{gcn_semantic_forward.1} parent=5 // pred_fallthru
      _
    %p343 = scmp.le.s32.totalorder 1, %s16
    %p344 = scmp.lt.s32.totalorder %s16, 3
    %p345 = pnand %p343, %p344
    %p346 = pneg %p345
    // Predicated region
    $region57: #{gcn_semantic_forward.1} parent=5 // pred_check
      _
    $region58: #{gcn_semantic_forward.1} parent=5 // pred_check_branch
      %348 = sbr.rel (%p345) target = $region60
    $region59: #{gcn_semantic_forward.1} parent=5 // pred_region
      %s349 = ssub.s32 %s16, 1
      %p350 = scmp.lt.s32.totalorder %s21, 1
      %s351 = scalar_select %p350, %s21, 1
      %s352 = smul.addr %s351, 4
      %s353 = smul.addr %s352, 4
      %s354 = scalar_lea.vmem %s0, %s353
      %p355 = pneg %p42
      %p356 = pneg %p39
      %p357 = scmp.lt.s32.totalorder %s21, 1
      %s358 = scalar_select %p357, %s21, 1
      %s359 = smul.addr %s358, 32
      %s360 = smul.addr %s359, 4
      %s361 = scalar_lea.vmem %s1, %s360
      %p362 = pneg %p68
      %p363 = pneg %p65
      %p364 = scmp.lt.s32.totalorder %s21, 1
      %s365 = scalar_select %p364, %s21, 1
      %s366 = smul.addr %s365, 8
      %s367 = scalar_lea.vmem %s2, %s366
      %p368 = pneg %p94
      %p369 = pneg %p91
      %p370 = scmp.lt.s32.totalorder %s21, 1
      %s371 = scalar_select %p370, %s21, 1
      %s372 = smul.addr %s371, 128
      %s373 = smul.addr %s372, 4
      %s374 = scalar_lea.vmem %s3, %s373
      %p375 = pneg %p120
      %p376 = pneg %p117
      %p377 = scmp.lt.s32.totalorder %s21, 1
      %s378 = scalar_select %p377, %s21, 1
      %s379 = scalar_lea.vmem %s4, %s378
      %p380 = pneg %p146
      %p381 = pneg %p143
      %p382 = pneg %p167
      %p383 = pneg %p164
      %p384 = pneg %p188
      %p385 = pneg %p185
      %p386 = pneg %p209
      %p387 = pneg %p206
      %p388 = pneg %p230
      %p389 = pneg %p227
      %p390 = pneg %p251
      %p391 = pneg %p248
      %p392 = pneg %p272
      %p393 = pneg %p269
      %p394 = scmp.lt.s32.totalorder %s21, 1
      %s395 = scalar_select %p394, %s21, 1
      %s396 = smul.addr %s395, 4
      %s397 = smul.addr %s396, 4
      %s398 = scalar_lea.vmem %s0, %s397
      %p399 = scmp.lt.s32.totalorder %s21, 1
      %s400 = scalar_select %p399, %s21, 1
      %s401 = smul.addr %s400, 32
      %s402 = smul.addr %s401, 4
      %s403 = scalar_lea.vmem %s1, %s402
      %p404 = scmp.lt.s32.totalorder %s21, 1
      %s405 = scalar_select %p404, %s21, 1
      %s406 = smul.addr %s405, 8
      %s407 = scalar_lea.vmem %s2, %s406
      %p408 = scmp.lt.s32.totalorder %s21, 1
      %s409 = scalar_select %p408, %s21, 1
      %s410 = smul.addr %s409, 128
      %s411 = smul.addr %s410, 4
      %s412 = scalar_lea.vmem %s3, %s411
      %p413 = scmp.lt.s32.totalorder %s21, 1
      %s414 = scalar_select %p413, %s21, 1
      %s415 = scalar_lea.vmem %s4, %s414
      %v417 = vld [vmem:[%s398] sm:$0xf]
      %v418 = vld [vmem:[%s398 + $0x4] sm:$0xf]
      %v419 = vld [vmem:[%s398 + $0x8] sm:$0xf]
      %v420 = vld [vmem:[%s398 + $0xc] sm:$0xf]
      %v421 = vld [vmem:[%s403] sm:$0xff]
      %v422 = vld [vmem:[%s403 + $0x8] sm:$0xff]
      %v423 = vld [vmem:[%s403 + $0x10] sm:$0xff]
      %v424 = vld [vmem:[%s403 + $0x18] sm:$0xff]
      %v425 = vld [vmem:[%s403 + $0x20] sm:$0xff]
      %v426 = vld [vmem:[%s403 + $0x28] sm:$0xff]
      %v427 = vld [vmem:[%s403 + $0x30] sm:$0xff]
      %v428 = vld [vmem:[%s403 + $0x38] sm:$0xff]
      %v429 = vld [vmem:[%s403 + $0x40] sm:$0xff]
      %v430 = vld [vmem:[%s403 + $0x48] sm:$0xff]
      %v431 = vld [vmem:[%s403 + $0x50] sm:$0xff]
      %v432 = vld [vmem:[%s403 + $0x58] sm:$0xff]
      %v433 = vld [vmem:[%s403 + $0x60] sm:$0xff]
      %v434 = vld [vmem:[%s403 + $0x68] sm:$0xff]
      %v435 = vld [vmem:[%s403 + $0x70] sm:$0xff]
      %v436 = vld [vmem:[%s403 + $0x78] sm:$0xff]
      %v437 = vld [vmem:[%s407] sm:$0xff]
      %v439 = vperm.slane %v437, 0
      %v440 = vperm.slane %v437, 1
      %v441 = vperm.slane %v437, 2
      %v442 = vperm.slane %v437, 3
      %v443 = vperm.slane %v437, 4
      %v444 = vperm.slane %v437, 5
      %v445 = vperm.slane %v437, 6
      %v446 = vperm.slane %v437, 7
      %v459 = vunpack.c.l.b16 %v417
      %v460 = vunpack.c.l.b16 %v418
      %v461 = vunpack.c.l.b16 %v419
      %v462 = vunpack.c.l.b16 %v420
      %v463 = vpack.c.b16 %v460, %v459
      %v464 = vpack.c.b16 %v462, %v461
      %v481 = vunpack.c.l.b16 %v421
      %v482 = vunpack.c.h.b16 %v421
      %v483 = vunpack.c.l.b16 %v422
      %v484 = vunpack.c.h.b16 %v422
      %v485 = vunpack.c.l.b16 %v423
      %v486 = vunpack.c.h.b16 %v423
      %v487 = vunpack.c.l.b16 %v424
      %v488 = vunpack.c.h.b16 %v424
      %v489 = vunpack.c.l.b16 %v425
      %v490 = vunpack.c.h.b16 %v425
      %v491 = vunpack.c.l.b16 %v426
      %v492 = vunpack.c.h.b16 %v426
      %v493 = vunpack.c.l.b16 %v427
      %v494 = vunpack.c.h.b16 %v427
      %v495 = vunpack.c.l.b16 %v428
      %v496 = vunpack.c.h.b16 %v428
      %v497 = vunpack.c.l.b16 %v429
      %v498 = vunpack.c.h.b16 %v429
      %v499 = vunpack.c.l.b16 %v430
      %v500 = vunpack.c.h.b16 %v430
      %v501 = vunpack.c.l.b16 %v431
      %v502 = vunpack.c.h.b16 %v431
      %v503 = vunpack.c.l.b16 %v432
      %v504 = vunpack.c.h.b16 %v432
      %v505 = vunpack.c.l.b16 %v433
      %v506 = vunpack.c.h.b16 %v433
      %v507 = vunpack.c.l.b16 %v434
      %v508 = vunpack.c.h.b16 %v434
      %v509 = vunpack.c.l.b16 %v435
      %v510 = vunpack.c.h.b16 %v435
      %v511 = vunpack.c.l.b16 %v436
      %v512 = vunpack.c.h.b16 %v436
      %v513 = vpack.c.b16 %v489, %v481
      %v514 = vpack.c.b16 %v490, %v482
      %v515 = vpack.c.b16 %v491, %v483
      %v516 = vpack.c.b16 %v492, %v484
      %v517 = vpack.c.b16 %v493, %v485
      %v518 = vpack.c.b16 %v494, %v486
      %v519 = vpack.c.b16 %v495, %v487
      %v520 = vpack.c.b16 %v496, %v488
      %v521 = vpack.c.b16 %v505, %v497
      %v522 = vpack.c.b16 %v506, %v498
      %v523 = vpack.c.b16 %v507, %v499
      %v524 = vpack.c.b16 %v508, %v500
      %v525 = vpack.c.b16 %v509, %v501
      %v526 = vpack.c.b16 %v510, %v502
      %v527 = vpack.c.b16 %v511, %v503
      %v528 = vpack.c.b16 %v512, %v504
      %vm545 = vcmask 261120
      %v547 = vsel %vm545, %v463, 0
      %v550 = vsel %vm545, %v464, 0
      %552 = vmatpush.bf16.msra.mxu0 0
      %553 = vmatpush.bf16.msra.mxu0 0
      %554 = vmatpush.bf16.msra.mxu0 0
      %555 = vmatpush.bf16.msra.mxu0 0
      %556 = vmatpush.bf16.msra.mxu0 0
      %557 = vmatpush.bf16.msra.mxu0 0
      %558 = vmatpush.bf16.msra.mxu0 %v521
      %559 = vmatpush.bf16.msra.mxu0 %v513
      %560 = vmatmul.bf16.gmra.mxu0 %v547
      %v561 = vpop.f32.mrf.mxu0
      %v562 = vadd.f32 %v439, %v561
      %v563 = vpop.f32.mrf.mxu0
      %v564 = vadd.f32 %v439, %v563
      %565 = vmatmul.bf16.gmra.mxu0 %v550
      %v566 = vpop.f32.mrf.mxu0
      %v567 = vadd.f32 %v439, %v566
      %v568 = vpop.f32.mrf.mxu0
      %v569 = vadd.f32 %v439, %v568
      %570 = vdwg.mxu0
      %571 = vmatpush.bf16.msra.mxu0 0
      %572 = vmatpush.bf16.msra.mxu0 0
      %573 = vmatpush.bf16.msra.mxu0 0
      %574 = vmatpush.bf16.msra.mxu0 0
      %575 = vmatpush.bf16.msra.mxu0 0
      %576 = vmatpush.bf16.msra.mxu0 0
      %577 = vmatpush.bf16.msra.mxu0 %v522
      %578 = vmatpush.bf16.msra.mxu0 %v514
      %579 = vmatmul.bf16.gmra.mxu0 %v547
      %v580 = vpop.f32.mrf.mxu0
      %v581 = vadd.f32 %v440, %v580
      %v582 = vpop.f32.mrf.mxu0
      %v583 = vadd.f32 %v440, %v582
      %584 = vmatmul.bf16.gmra.mxu0 %v550
      %v585 = vpop.f32.mrf.mxu0
      %v586 = vadd.f32 %v440, %v585
      %v587 = vpop.f32.mrf.mxu0
      %v588 = vadd.f32 %v440, %v587
      %589 = vdwg.mxu0
      %590 = vmatpush.bf16.msra.mxu0 0
      %591 = vmatpush.bf16.msra.mxu0 0
      %592 = vmatpush.bf16.msra.mxu0 0
      %593 = vmatpush.bf16.msra.mxu0 0
      %594 = vmatpush.bf16.msra.mxu0 0
      %595 = vmatpush.bf16.msra.mxu0 0
      %596 = vmatpush.bf16.msra.mxu0 %v523
      %597 = vmatpush.bf16.msra.mxu0 %v515
      %598 = vmatmul.bf16.gmra.mxu0 %v547
      %v599 = vpop.f32.mrf.mxu0
      %v600 = vadd.f32 %v441, %v599
      %v601 = vpop.f32.mrf.mxu0
      %v602 = vadd.f32 %v441, %v601
      %603 = vmatmul.bf16.gmra.mxu0 %v550
      %v604 = vpop.f32.mrf.mxu0
      %v605 = vadd.f32 %v441, %v604
      %v606 = vpop.f32.mrf.mxu0
      %v607 = vadd.f32 %v441, %v606
      %608 = vdwg.mxu0
      %609 = vmatpush.bf16.msra.mxu0 0
      %610 = vmatpush.bf16.msra.mxu0 0
      %611 = vmatpush.bf16.msra.mxu0 0
      %612 = vmatpush.bf16.msra.mxu0 0
      %613 = vmatpush.bf16.msra.mxu0 0
      %614 = vmatpush.bf16.msra.mxu0 0
      %615 = vmatpush.bf16.msra.mxu0 %v524
      %616 = vmatpush.bf16.msra.mxu0 %v516
      %617 = vmatmul.bf16.gmra.mxu0 %v547
      %v618 = vpop.f32.mrf.mxu0
      %v619 = vadd.f32 %v442, %v618
      %v620 = vpop.f32.mrf.mxu0
      %v621 = vadd.f32 %v442, %v620
      %622 = vmatmul.bf16.gmra.mxu0 %v550
      %v623 = vpop.f32.mrf.mxu0
      %v624 = vadd.f32 %v442, %v623
      %v625 = vpop.f32.mrf.mxu0
      %v626 = vadd.f32 %v442, %v625
      %627 = vdwg.mxu0
      %628 = vmatpush.bf16.msra.mxu0 0
      %629 = vmatpush.bf16.msra.mxu0 0
      %630 = vmatpush.bf16.msra.mxu0 0
      %631 = vmatpush.bf16.msra.mxu0 0
      %632 = vmatpush.bf16.msra.mxu0 0
      %633 = vmatpush.bf16.msra.mxu0 0
      %634 = vmatpush.bf16.msra.mxu0 %v525
      %635 = vmatpush.bf16.msra.mxu0 %v517
      %636 = vmatmul.bf16.gmra.mxu0 %v547
      %v637 = vpop.f32.mrf.mxu0
      %v638 = vadd.f32 %v443, %v637
      %v639 = vpop.f32.mrf.mxu0
      %v640 = vadd.f32 %v443, %v639
      %641 = vmatmul.bf16.gmra.mxu0 %v550
      %v642 = vpop.f32.mrf.mxu0
      %v643 = vadd.f32 %v443, %v642
      %v644 = vpop.f32.mrf.mxu0
      %v645 = vadd.f32 %v443, %v644
      %646 = vdwg.mxu0
      %647 = vmatpush.bf16.msra.mxu0 0
      %648 = vmatpush.bf16.msra.mxu0 0
      %649 = vmatpush.bf16.msra.mxu0 0
      %650 = vmatpush.bf16.msra.mxu0 0
      %651 = vmatpush.bf16.msra.mxu0 0
      %652 = vmatpush.bf16.msra.mxu0 0
      %653 = vmatpush.bf16.msra.mxu0 %v526
      %654 = vmatpush.bf16.msra.mxu0 %v518
      %655 = vmatmul.bf16.gmra.mxu0 %v547
      %v656 = vpop.f32.mrf.mxu0
      %v657 = vadd.f32 %v444, %v656
      %v658 = vpop.f32.mrf.mxu0
      %v659 = vadd.f32 %v444, %v658
      %660 = vmatmul.bf16.gmra.mxu0 %v550
      %v661 = vpop.f32.mrf.mxu0
      %v662 = vadd.f32 %v444, %v661
      %v663 = vpop.f32.mrf.mxu0
      %v664 = vadd.f32 %v444, %v663
      %665 = vdwg.mxu0
      %666 = vmatpush.bf16.msra.mxu0 0
      %667 = vmatpush.bf16.msra.mxu0 0
      %668 = vmatpush.bf16.msra.mxu0 0
      %669 = vmatpush.bf16.msra.mxu0 0
      %670 = vmatpush.bf16.msra.mxu0 0
      %671 = vmatpush.bf16.msra.mxu0 0
      %672 = vmatpush.bf16.msra.mxu0 %v527
      %673 = vmatpush.bf16.msra.mxu0 %v519
      %674 = vmatmul.bf16.gmra.mxu0 %v547
      %v675 = vpop.f32.mrf.mxu0
      %v676 = vadd.f32 %v445, %v675
      %v677 = vpop.f32.mrf.mxu0
      %v678 = vadd.f32 %v445, %v677
      %679 = vmatmul.bf16.gmra.mxu0 %v550
      %v680 = vpop.f32.mrf.mxu0
      %v681 = vadd.f32 %v445, %v680
      %v682 = vpop.f32.mrf.mxu0
      %v683 = vadd.f32 %v445, %v682
      %684 = vdwg.mxu0
      %685 = vmatpush.bf16.msra.mxu0 0
      %686 = vmatpush.bf16.msra.mxu0 0
      %687 = vmatpush.bf16.msra.mxu0 0
      %688 = vmatpush.bf16.msra.mxu0 0
      %689 = vmatpush.bf16.msra.mxu0 0
      %690 = vmatpush.bf16.msra.mxu0 0
      %691 = vmatpush.bf16.msra.mxu0 %v528
      %692 = vmatpush.bf16.msra.mxu0 %v520
      %693 = vmatmul.bf16.gmra.mxu0 %v547
      %v694 = vpop.f32.mrf.mxu0
      %v695 = vadd.f32 %v446, %v694
      %v696 = vpop.f32.mrf.mxu0
      %v697 = vadd.f32 %v446, %v696
      %698 = vmatmul.bf16.gmra.mxu0 %v550
      %v699 = vpop.f32.mrf.mxu0
      %v700 = vadd.f32 %v446, %v699
      %v701 = vpop.f32.mrf.mxu0
      %v702 = vadd.f32 %v446, %v701
      %703 = vdwg.mxu0
      %v704 = vmax.f32 %v562, 0.0
      %v705 = vmax.f32 %v581, 0.0
      %v706 = vmax.f32 %v600, 0.0
      %v707 = vmax.f32 %v619, 0.0
      %v708 = vmax.f32 %v638, 0.0
      %v709 = vmax.f32 %v657, 0.0
      %v710 = vmax.f32 %v676, 0.0
      %v711 = vmax.f32 %v695, 0.0
      %v712 = vmax.f32 %v564, 0.0
      %v713 = vmax.f32 %v583, 0.0
      %v714 = vmax.f32 %v602, 0.0
      %v715 = vmax.f32 %v621, 0.0
      %v716 = vmax.f32 %v640, 0.0
      %v717 = vmax.f32 %v659, 0.0
      %v718 = vmax.f32 %v678, 0.0
      %v719 = vmax.f32 %v697, 0.0
      %v720 = vmax.f32 %v567, 0.0
      %v721 = vmax.f32 %v586, 0.0
      %v722 = vmax.f32 %v605, 0.0
      %v723 = vmax.f32 %v624, 0.0
      %v724 = vmax.f32 %v643, 0.0
      %v725 = vmax.f32 %v662, 0.0
      %v726 = vmax.f32 %v681, 0.0
      %v727 = vmax.f32 %v700, 0.0
      %v728 = vmax.f32 %v569, 0.0
      %v729 = vmax.f32 %v588, 0.0
      %v730 = vmax.f32 %v607, 0.0
      %v731 = vmax.f32 %v626, 0.0
      %v732 = vmax.f32 %v645, 0.0
      %v733 = vmax.f32 %v664, 0.0
      %v734 = vmax.f32 %v683, 0.0
      %v735 = vmax.f32 %v702, 0.0
      %v736 = vpack.c.bf16 %v712, %v704
      %v737 = vpack.c.bf16 %v713, %v705
      %v738 = vpack.c.bf16 %v714, %v706
      %v739 = vpack.c.bf16 %v715, %v707
      %v740 = vpack.c.bf16 %v716, %v708
      %v741 = vpack.c.bf16 %v717, %v709
      %v742 = vpack.c.bf16 %v718, %v710
      %v743 = vpack.c.bf16 %v719, %v711
      %v744 = vpack.c.bf16 %v728, %v720
      %v745 = vpack.c.bf16 %v729, %v721
      %v746 = vpack.c.bf16 %v730, %v722
      %v747 = vpack.c.bf16 %v731, %v723
      %v748 = vpack.c.bf16 %v732, %v724
      %v749 = vpack.c.bf16 %v733, %v725
      %v750 = vpack.c.bf16 %v734, %v726
      %v751 = vpack.c.bf16 %v735, %v727
      %v752 = vld [vmem:[%s412] sm:$0xf]
      %v753 = vld [vmem:[%s412 + $0x4] sm:$0xf]
      %v754 = vld [vmem:[%s412 + $0x8] sm:$0xf]
      %v755 = vld [vmem:[%s412 + $0xc] sm:$0xf]
      %v756 = vld [vmem:[%s412 + $0x10] sm:$0xf]
      %v757 = vld [vmem:[%s412 + $0x14] sm:$0xf]
      %v758 = vld [vmem:[%s412 + $0x18] sm:$0xf]
      %v759 = vld [vmem:[%s412 + $0x1c] sm:$0xf]
      %v760 = vld [vmem:[%s412 + $0x20] sm:$0xf]
      %v761 = vld [vmem:[%s412 + $0x24] sm:$0xf]
      %v762 = vld [vmem:[%s412 + $0x28] sm:$0xf]
      %v763 = vld [vmem:[%s412 + $0x2c] sm:$0xf]
      %v764 = vld [vmem:[%s412 + $0x30] sm:$0xf]
      %v765 = vld [vmem:[%s412 + $0x34] sm:$0xf]
      %v766 = vld [vmem:[%s412 + $0x38] sm:$0xf]
      %v767 = vld [vmem:[%s412 + $0x3c] sm:$0xf]
      %v768 = vld [vmem:[%s412 + $0x40] sm:$0xf]
      %v769 = vld [vmem:[%s412 + $0x44] sm:$0xf]
      %v770 = vld [vmem:[%s412 + $0x48] sm:$0xf]
      %v771 = vld [vmem:[%s412 + $0x4c] sm:$0xf]
      %v772 = vld [vmem:[%s412 + $0x50] sm:$0xf]
      %v773 = vld [vmem:[%s412 + $0x54] sm:$0xf]
      %v774 = vld [vmem:[%s412 + $0x58] sm:$0xf]
      %v775 = vld [vmem:[%s412 + $0x5c] sm:$0xf]
      %v776 = vld [vmem:[%s412 + $0x60] sm:$0xf]
      %v777 = vld [vmem:[%s412 + $0x64] sm:$0xf]
      %v778 = vld [vmem:[%s412 + $0x68] sm:$0xf]
      %v779 = vld [vmem:[%s412 + $0x6c] sm:$0xf]
      %v780 = vld [vmem:[%s412 + $0x70] sm:$0xf]
      %v781 = vld [vmem:[%s412 + $0x74] sm:$0xf]
      %v782 = vld [vmem:[%s412 + $0x78] sm:$0xf]
      %v783 = vld [vmem:[%s412 + $0x7c] sm:$0xf]
      %v784 = vld [vmem:[%s412 + $0x80] sm:$0xf]
      %v785 = vld [vmem:[%s412 + $0x84] sm:$0xf]
      %v786 = vld [vmem:[%s412 + $0x88] sm:$0xf]
      %v787 = vld [vmem:[%s412 + $0x8c] sm:$0xf]
      %v788 = vld [vmem:[%s412 + $0x90] sm:$0xf]
      %v789 = vld [vmem:[%s412 + $0x94] sm:$0xf]
      %v790 = vld [vmem:[%s412 + $0x98] sm:$0xf]
      %v791 = vld [vmem:[%s412 + $0x9c] sm:$0xf]
      %v792 = vld [vmem:[%s412 + $0xa0] sm:$0xf]
      %v793 = vld [vmem:[%s412 + $0xa4] sm:$0xf]
      %v794 = vld [vmem:[%s412 + $0xa8] sm:$0xf]
      %v795 = vld [vmem:[%s412 + $0xac] sm:$0xf]
      %v796 = vld [vmem:[%s412 + $0xb0] sm:$0xf]
      %v797 = vld [vmem:[%s412 + $0xb4] sm:$0xf]
      %v798 = vld [vmem:[%s412 + $0xb8] sm:$0xf]
      %v799 = vld [vmem:[%s412 + $0xbc] sm:$0xf]
      %v800 = vld [vmem:[%s412 + $0xc0] sm:$0xf]
      %v801 = vld [vmem:[%s412 + $0xc4] sm:$0xf]
      %v802 = vld [vmem:[%s412 + $0xc8] sm:$0xf]
      %v803 = vld [vmem:[%s412 + $0xcc] sm:$0xf]
      %v804 = vld [vmem:[%s412 + $0xd0] sm:$0xf]
      %v805 = vld [vmem:[%s412 + $0xd4] sm:$0xf]
      %v806 = vld [vmem:[%s412 + $0xd8] sm:$0xf]
      %v807 = vld [vmem:[%s412 + $0xdc] sm:$0xf]
      %v808 = vld [vmem:[%s412 + $0xe0] sm:$0xf]
      %v809 = vld [vmem:[%s412 + $0xe4] sm:$0xf]
      %v810 = vld [vmem:[%s412 + $0xe8] sm:$0xf]
      %v811 = vld [vmem:[%s412 + $0xec] sm:$0xf]
      %v812 = vld [vmem:[%s412 + $0xf0] sm:$0xf]
      %v813 = vld [vmem:[%s412 + $0xf4] sm:$0xf]
      %v814 = vld [vmem:[%s412 + $0xf8] sm:$0xf]
      %v815 = vld [vmem:[%s412 + $0xfc] sm:$0xf]
      %v816 = vld [vmem:[%s412 + $0x100] sm:$0xf]
      %v817 = vld [vmem:[%s412 + $0x104] sm:$0xf]
      %v818 = vld [vmem:[%s412 + $0x108] sm:$0xf]
      %v819 = vld [vmem:[%s412 + $0x10c] sm:$0xf]
      %v820 = vld [vmem:[%s412 + $0x110] sm:$0xf]
      %v821 = vld [vmem:[%s412 + $0x114] sm:$0xf]
      %v822 = vld [vmem:[%s412 + $0x118] sm:$0xf]
      %v823 = vld [vmem:[%s412 + $0x11c] sm:$0xf]
      %v824 = vld [vmem:[%s412 + $0x120] sm:$0xf]
      %v825 = vld [vmem:[%s412 + $0x124] sm:$0xf]
      %v826 = vld [vmem:[%s412 + $0x128] sm:$0xf]
      %v827 = vld [vmem:[%s412 + $0x12c] sm:$0xf]
      %v828 = vld [vmem:[%s412 + $0x130] sm:$0xf]
      %v829 = vld [vmem:[%s412 + $0x134] sm:$0xf]
      %v830 = vld [vmem:[%s412 + $0x138] sm:$0xf]
      %v831 = vld [vmem:[%s412 + $0x13c] sm:$0xf]
      %v832 = vld [vmem:[%s412 + $0x140] sm:$0xf]
      %v833 = vld [vmem:[%s412 + $0x144] sm:$0xf]
      %v834 = vld [vmem:[%s412 + $0x148] sm:$0xf]
      %v835 = vld [vmem:[%s412 + $0x14c] sm:$0xf]
      %v836 = vld [vmem:[%s412 + $0x150] sm:$0xf]
      %v837 = vld [vmem:[%s412 + $0x154] sm:$0xf]
      %v838 = vld [vmem:[%s412 + $0x158] sm:$0xf]
      %v839 = vld [vmem:[%s412 + $0x15c] sm:$0xf]
      %v840 = vld [vmem:[%s412 + $0x160] sm:$0xf]
      %v841 = vld [vmem:[%s412 + $0x164] sm:$0xf]
      %v842 = vld [vmem:[%s412 + $0x168] sm:$0xf]
      %v843 = vld [vmem:[%s412 + $0x16c] sm:$0xf]
      %v844 = vld [vmem:[%s412 + $0x170] sm:$0xf]
      %v845 = vld [vmem:[%s412 + $0x174] sm:$0xf]
      %v846 = vld [vmem:[%s412 + $0x178] sm:$0xf]
      %v847 = vld [vmem:[%s412 + $0x17c] sm:$0xf]
      %v848 = vld [vmem:[%s412 + $0x180] sm:$0xf]
      %v849 = vld [vmem:[%s412 + $0x184] sm:$0xf]
      %v850 = vld [vmem:[%s412 + $0x188] sm:$0xf]
      %v851 = vld [vmem:[%s412 + $0x18c] sm:$0xf]
      %v852 = vld [vmem:[%s412 + $0x190] sm:$0xf]
      %v853 = vld [vmem:[%s412 + $0x194] sm:$0xf]
      %v854 = vld [vmem:[%s412 + $0x198] sm:$0xf]
      %v855 = vld [vmem:[%s412 + $0x19c] sm:$0xf]
      %v856 = vld [vmem:[%s412 + $0x1a0] sm:$0xf]
      %v857 = vld [vmem:[%s412 + $0x1a4] sm:$0xf]
      %v858 = vld [vmem:[%s412 + $0x1a8] sm:$0xf]
      %v859 = vld [vmem:[%s412 + $0x1ac] sm:$0xf]
      %v860 = vld [vmem:[%s412 + $0x1b0] sm:$0xf]
      %v861 = vld [vmem:[%s412 + $0x1b4] sm:$0xf]
      %v862 = vld [vmem:[%s412 + $0x1b8] sm:$0xf]
      %v863 = vld [vmem:[%s412 + $0x1bc] sm:$0xf]
      %v864 = vld [vmem:[%s412 + $0x1c0] sm:$0xf]
      %v865 = vld [vmem:[%s412 + $0x1c4] sm:$0xf]
      %v866 = vld [vmem:[%s412 + $0x1c8] sm:$0xf]
      %v867 = vld [vmem:[%s412 + $0x1cc] sm:$0xf]
      %v868 = vld [vmem:[%s412 + $0x1d0] sm:$0xf]
      %v869 = vld [vmem:[%s412 + $0x1d4] sm:$0xf]
      %v870 = vld [vmem:[%s412 + $0x1d8] sm:$0xf]
      %v871 = vld [vmem:[%s412 + $0x1dc] sm:$0xf]
      %v872 = vld [vmem:[%s412 + $0x1e0] sm:$0xf]
      %v873 = vld [vmem:[%s412 + $0x1e4] sm:$0xf]
      %v874 = vld [vmem:[%s412 + $0x1e8] sm:$0xf]
      %v875 = vld [vmem:[%s412 + $0x1ec] sm:$0xf]
      %v876 = vld [vmem:[%s412 + $0x1f0] sm:$0xf]
      %v877 = vld [vmem:[%s412 + $0x1f4] sm:$0xf]
      %v878 = vld [vmem:[%s412 + $0x1f8] sm:$0xf]
      %v879 = vld [vmem:[%s412 + $0x1fc] sm:$0xf]
      %v1008 = vunpack.c.l.b16 %v752
      %v1009 = vunpack.c.l.b16 %v753
      %v1010 = vunpack.c.l.b16 %v754
      %v1011 = vunpack.c.l.b16 %v755
      %v1012 = vunpack.c.l.b16 %v756
      %v1013 = vunpack.c.l.b16 %v757
      %v1014 = vunpack.c.l.b16 %v758
      %v1015 = vunpack.c.l.b16 %v759
      %v1016 = vunpack.c.l.b16 %v760
      %v1017 = vunpack.c.l.b16 %v761
      %v1018 = vunpack.c.l.b16 %v762
      %v1019 = vunpack.c.l.b16 %v763
      %v1020 = vunpack.c.l.b16 %v764
      %v1021 = vunpack.c.l.b16 %v765
      %v1022 = vunpack.c.l.b16 %v766
      %v1023 = vunpack.c.l.b16 %v767
      %v1024 = vunpack.c.l.b16 %v768
      %v1025 = vunpack.c.l.b16 %v769
      %v1026 = vunpack.c.l.b16 %v770
      %v1027 = vunpack.c.l.b16 %v771
      %v1028 = vunpack.c.l.b16 %v772
      %v1029 = vunpack.c.l.b16 %v773
      %v1030 = vunpack.c.l.b16 %v774
      %v1031 = vunpack.c.l.b16 %v775
      %v1032 = vunpack.c.l.b16 %v776
      %v1033 = vunpack.c.l.b16 %v777
      %v1034 = vunpack.c.l.b16 %v778
      %v1035 = vunpack.c.l.b16 %v779
      %v1036 = vunpack.c.l.b16 %v780
      %v1037 = vunpack.c.l.b16 %v781
      %v1038 = vunpack.c.l.b16 %v782
      %v1039 = vunpack.c.l.b16 %v783
      %v1040 = vunpack.c.l.b16 %v784
      %v1041 = vunpack.c.l.b16 %v785
      %v1042 = vunpack.c.l.b16 %v786
      %v1043 = vunpack.c.l.b16 %v787
      %v1044 = vunpack.c.l.b16 %v788
      %v1045 = vunpack.c.l.b16 %v789
      %v1046 = vunpack.c.l.b16 %v790
      %v1047 = vunpack.c.l.b16 %v791
      %v1048 = vunpack.c.l.b16 %v792
      %v1049 = vunpack.c.l.b16 %v793
      %v1050 = vunpack.c.l.b16 %v794
      %v1051 = vunpack.c.l.b16 %v795
      %v1052 = vunpack.c.l.b16 %v796
      %v1053 = vunpack.c.l.b16 %v797
      %v1054 = vunpack.c.l.b16 %v798
      %v1055 = vunpack.c.l.b16 %v799
      %v1056 = vunpack.c.l.b16 %v800
      %v1057 = vunpack.c.l.b16 %v801
      %v1058 = vunpack.c.l.b16 %v802
      %v1059 = vunpack.c.l.b16 %v803
      %v1060 = vunpack.c.l.b16 %v804
      %v1061 = vunpack.c.l.b16 %v805
      %v1062 = vunpack.c.l.b16 %v806
      %v1063 = vunpack.c.l.b16 %v807
      %v1064 = vunpack.c.l.b16 %v808
      %v1065 = vunpack.c.l.b16 %v809
      %v1066 = vunpack.c.l.b16 %v810
      %v1067 = vunpack.c.l.b16 %v811
      %v1068 = vunpack.c.l.b16 %v812
      %v1069 = vunpack.c.l.b16 %v813
      %v1070 = vunpack.c.l.b16 %v814
      %v1071 = vunpack.c.l.b16 %v815
      %v1072 = vunpack.c.l.b16 %v816
      %v1073 = vunpack.c.l.b16 %v817
      %v1074 = vunpack.c.l.b16 %v818
      %v1075 = vunpack.c.l.b16 %v819
      %v1076 = vunpack.c.l.b16 %v820
      %v1077 = vunpack.c.l.b16 %v821
      %v1078 = vunpack.c.l.b16 %v822
      %v1079 = vunpack.c.l.b16 %v823
      %v1080 = vunpack.c.l.b16 %v824
      %v1081 = vunpack.c.l.b16 %v825
      %v1082 = vunpack.c.l.b16 %v826
      %v1083 = vunpack.c.l.b16 %v827
      %v1084 = vunpack.c.l.b16 %v828
      %v1085 = vunpack.c.l.b16 %v829
      %v1086 = vunpack.c.l.b16 %v830
      %v1087 = vunpack.c.l.b16 %v831
      %v1088 = vunpack.c.l.b16 %v832
      %v1089 = vunpack.c.l.b16 %v833
      %v1090 = vunpack.c.l.b16 %v834
      %v1091 = vunpack.c.l.b16 %v835
      %v1092 = vunpack.c.l.b16 %v836
      %v1093 = vunpack.c.l.b16 %v837
      %v1094 = vunpack.c.l.b16 %v838
      %v1095 = vunpack.c.l.b16 %v839
      %v1096 = vunpack.c.l.b16 %v840
      %v1097 = vunpack.c.l.b16 %v841
      %v1098 = vunpack.c.l.b16 %v842
      %v1099 = vunpack.c.l.b16 %v843
      %v1100 = vunpack.c.l.b16 %v844
      %v1101 = vunpack.c.l.b16 %v845
      %v1102 = vunpack.c.l.b16 %v846
      %v1103 = vunpack.c.l.b16 %v847
      %v1104 = vunpack.c.l.b16 %v848
      %v1105 = vunpack.c.l.b16 %v849
      %v1106 = vunpack.c.l.b16 %v850
      %v1107 = vunpack.c.l.b16 %v851
      %v1108 = vunpack.c.l.b16 %v852
      %v1109 = vunpack.c.l.b16 %v853
      %v1110 = vunpack.c.l.b16 %v854
      %v1111 = vunpack.c.l.b16 %v855
      %v1112 = vunpack.c.l.b16 %v856
      %v1113 = vunpack.c.l.b16 %v857
      %v1114 = vunpack.c.l.b16 %v858
      %v1115 = vunpack.c.l.b16 %v859
      %v1116 = vunpack.c.l.b16 %v860
      %v1117 = vunpack.c.l.b16 %v861
      %v1118 = vunpack.c.l.b16 %v862
      %v1119 = vunpack.c.l.b16 %v863
      %v1120 = vunpack.c.l.b16 %v864
      %v1121 = vunpack.c.l.b16 %v865
      %v1122 = vunpack.c.l.b16 %v866
      %v1123 = vunpack.c.l.b16 %v867
      %v1124 = vunpack.c.l.b16 %v868
      %v1125 = vunpack.c.l.b16 %v869
      %v1126 = vunpack.c.l.b16 %v870
      %v1127 = vunpack.c.l.b16 %v871
      %v1128 = vunpack.c.l.b16 %v872
      %v1129 = vunpack.c.l.b16 %v873
      %v1130 = vunpack.c.l.b16 %v874
      %v1131 = vunpack.c.l.b16 %v875
      %v1132 = vunpack.c.l.b16 %v876
      %v1133 = vunpack.c.l.b16 %v877
      %v1134 = vunpack.c.l.b16 %v878
      %v1135 = vunpack.c.l.b16 %v879
      %v1136 = vpack.c.b16 %v1009, %v1008
      %v1137 = vpack.c.b16 %v1011, %v1010
      %v1138 = vpack.c.b16 %v1013, %v1012
      %v1139 = vpack.c.b16 %v1015, %v1014
      %v1140 = vpack.c.b16 %v1017, %v1016
      %v1141 = vpack.c.b16 %v1019, %v1018
      %v1142 = vpack.c.b16 %v1021, %v1020
      %v1143 = vpack.c.b16 %v1023, %v1022
      %v1144 = vpack.c.b16 %v1025, %v1024
      %v1145 = vpack.c.b16 %v1027, %v1026
      %v1146 = vpack.c.b16 %v1029, %v1028
      %v1147 = vpack.c.b16 %v1031, %v1030
      %v1148 = vpack.c.b16 %v1033, %v1032
      %v1149 = vpack.c.b16 %v1035, %v1034
      %v1150 = vpack.c.b16 %v1037, %v1036
      %v1151 = vpack.c.b16 %v1039, %v1038
      %v1152 = vpack.c.b16 %v1041, %v1040
      %v1153 = vpack.c.b16 %v1043, %v1042
      %v1154 = vpack.c.b16 %v1045, %v1044
      %v1155 = vpack.c.b16 %v1047, %v1046
      %v1156 = vpack.c.b16 %v1049, %v1048
      %v1157 = vpack.c.b16 %v1051, %v1050
      %v1158 = vpack.c.b16 %v1053, %v1052
      %v1159 = vpack.c.b16 %v1055, %v1054
      %v1160 = vpack.c.b16 %v1057, %v1056
      %v1161 = vpack.c.b16 %v1059, %v1058
      %v1162 = vpack.c.b16 %v1061, %v1060
      %v1163 = vpack.c.b16 %v1063, %v1062
      %v1164 = vpack.c.b16 %v1065, %v1064
      %v1165 = vpack.c.b16 %v1067, %v1066
      %v1166 = vpack.c.b16 %v1069, %v1068
      %v1167 = vpack.c.b16 %v1071, %v1070
      %v1168 = vpack.c.b16 %v1073, %v1072
      %v1169 = vpack.c.b16 %v1075, %v1074
      %v1170 = vpack.c.b16 %v1077, %v1076
      %v1171 = vpack.c.b16 %v1079, %v1078
      %v1172 = vpack.c.b16 %v1081, %v1080
      %v1173 = vpack.c.b16 %v1083, %v1082
      %v1174 = vpack.c.b16 %v1085, %v1084
      %v1175 = vpack.c.b16 %v1087, %v1086
      %v1176 = vpack.c.b16 %v1089, %v1088
      %v1177 = vpack.c.b16 %v1091, %v1090
      %v1178 = vpack.c.b16 %v1093, %v1092
      %v1179 = vpack.c.b16 %v1095, %v1094
      %v1180 = vpack.c.b16 %v1097, %v1096
      %v1181 = vpack.c.b16 %v1099, %v1098
      %v1182 = vpack.c.b16 %v1101, %v1100
      %v1183 = vpack.c.b16 %v1103, %v1102
      %v1184 = vpack.c.b16 %v1105, %v1104
      %v1185 = vpack.c.b16 %v1107, %v1106
      %v1186 = vpack.c.b16 %v1109, %v1108
      %v1187 = vpack.c.b16 %v1111, %v1110
      %v1188 = vpack.c.b16 %v1113, %v1112
      %v1189 = vpack.c.b16 %v1115, %v1114
      %v1190 = vpack.c.b16 %v1117, %v1116
      %v1191 = vpack.c.b16 %v1119, %v1118
      %v1192 = vpack.c.b16 %v1121, %v1120
      %v1193 = vpack.c.b16 %v1123, %v1122
      %v1194 = vpack.c.b16 %v1125, %v1124
      %v1195 = vpack.c.b16 %v1127, %v1126
      %v1196 = vpack.c.b16 %v1129, %v1128
      %v1197 = vpack.c.b16 %v1131, %v1130
      %v1198 = vpack.c.b16 %v1133, %v1132
      %v1199 = vpack.c.b16 %v1135, %v1134
      %1264 = vmatpush.bf16.msra.mxu0 %v1143
      %1265 = vmatpush.bf16.msra.mxu0 %v1142
      %1266 = vmatpush.bf16.msra.mxu0 %v1141
      %1267 = vmatpush.bf16.msra.mxu0 %v1140
      %1268 = vmatpush.bf16.msra.mxu0 %v1139
      %1269 = vmatpush.bf16.msra.mxu0 %v1138
      %1270 = vmatpush.bf16.msra.mxu0 %v1137
      %1271 = vmatpush.bf16.msra.mxu0 %v1136
      %1272 = vmatmul.bf16.gmra.mxu0 %v736
      %v1273 = vpop.f32.mrf.mxu0
      %v1274 = vadd.f32 0.0, %v1273
      %v1275 = vpop.f32.mrf.mxu0
      %v1276 = vadd.f32 0.0, %v1275
      %1277 = vmatmul.bf16.gmra.mxu0 %v744
      %v1278 = vpop.f32.mrf.mxu0
      %v1279 = vadd.f32 0.0, %v1278
      %v1280 = vpop.f32.mrf.mxu0
      %v1281 = vadd.f32 0.0, %v1280
      %1282 = vdwg.mxu0
      %1283 = vmatpush.bf16.msra.mxu0 %v1151
      %1284 = vmatpush.bf16.msra.mxu0 %v1150
      %1285 = vmatpush.bf16.msra.mxu0 %v1149
      %1286 = vmatpush.bf16.msra.mxu0 %v1148
      %1287 = vmatpush.bf16.msra.mxu0 %v1147
      %1288 = vmatpush.bf16.msra.mxu0 %v1146
      %1289 = vmatpush.bf16.msra.mxu0 %v1145
      %1290 = vmatpush.bf16.msra.mxu0 %v1144
      %1291 = vmatmul.bf16.gmra.mxu0 %v737
      %v1292 = vpop.f32.mrf.mxu0
      %v1293 = vadd.f32 %v1274, %v1292
      %v1294 = vpop.f32.mrf.mxu0
      %v1295 = vadd.f32 %v1276, %v1294
      %1296 = vmatmul.bf16.gmra.mxu0 %v745
      %v1297 = vpop.f32.mrf.mxu0
      %v1298 = vadd.f32 %v1279, %v1297
      %v1299 = vpop.f32.mrf.mxu0
      %v1300 = vadd.f32 %v1281, %v1299
      %1301 = vdwg.mxu0
      %1302 = vmatpush.bf16.msra.mxu0 %v1159
      %1303 = vmatpush.bf16.msra.mxu0 %v1158
      %1304 = vmatpush.bf16.msra.mxu0 %v1157
      %1305 = vmatpush.bf16.msra.mxu0 %v1156
      %1306 = vmatpush.bf16.msra.mxu0 %v1155
      %1307 = vmatpush.bf16.msra.mxu0 %v1154
      %1308 = vmatpush.bf16.msra.mxu0 %v1153
      %1309 = vmatpush.bf16.msra.mxu0 %v1152
      %1310 = vmatmul.bf16.gmra.mxu0 %v738
      %v1311 = vpop.f32.mrf.mxu0
      %v1312 = vadd.f32 %v1293, %v1311
      %v1313 = vpop.f32.mrf.mxu0
      %v1314 = vadd.f32 %v1295, %v1313
      %1315 = vmatmul.bf16.gmra.mxu0 %v746
      %v1316 = vpop.f32.mrf.mxu0
      %v1317 = vadd.f32 %v1298, %v1316
      %v1318 = vpop.f32.mrf.mxu0
      %v1319 = vadd.f32 %v1300, %v1318
      %1320 = vdwg.mxu0
      %1321 = vmatpush.bf16.msra.mxu0 %v1167
      %1322 = vmatpush.bf16.msra.mxu0 %v1166
      %1323 = vmatpush.bf16.msra.mxu0 %v1165
      %1324 = vmatpush.bf16.msra.mxu0 %v1164
      %1325 = vmatpush.bf16.msra.mxu0 %v1163
      %1326 = vmatpush.bf16.msra.mxu0 %v1162
      %1327 = vmatpush.bf16.msra.mxu0 %v1161
      %1328 = vmatpush.bf16.msra.mxu0 %v1160
      %1329 = vmatmul.bf16.gmra.mxu0 %v739
      %v1330 = vpop.f32.mrf.mxu0
      %v1331 = vadd.f32 %v1312, %v1330
      %v1332 = vpop.f32.mrf.mxu0
      %v1333 = vadd.f32 %v1314, %v1332
      %1334 = vmatmul.bf16.gmra.mxu0 %v747
      %v1335 = vpop.f32.mrf.mxu0
      %v1336 = vadd.f32 %v1317, %v1335
      %v1337 = vpop.f32.mrf.mxu0
      %v1338 = vadd.f32 %v1319, %v1337
      %1339 = vdwg.mxu0
      %1340 = vmatpush.bf16.msra.mxu0 %v1175
      %1341 = vmatpush.bf16.msra.mxu0 %v1174
      %1342 = vmatpush.bf16.msra.mxu0 %v1173
      %1343 = vmatpush.bf16.msra.mxu0 %v1172
      %1344 = vmatpush.bf16.msra.mxu0 %v1171
      %1345 = vmatpush.bf16.msra.mxu0 %v1170
      %1346 = vmatpush.bf16.msra.mxu0 %v1169
      %1347 = vmatpush.bf16.msra.mxu0 %v1168
      %1348 = vmatmul.bf16.gmra.mxu0 %v740
      %v1349 = vpop.f32.mrf.mxu0
      %v1350 = vadd.f32 %v1331, %v1349
      %v1351 = vpop.f32.mrf.mxu0
      %v1352 = vadd.f32 %v1333, %v1351
      %1353 = vmatmul.bf16.gmra.mxu0 %v748
      %v1354 = vpop.f32.mrf.mxu0
      %v1355 = vadd.f32 %v1336, %v1354
      %v1356 = vpop.f32.mrf.mxu0
      %v1357 = vadd.f32 %v1338, %v1356
      %1358 = vdwg.mxu0
      %1359 = vmatpush.bf16.msra.mxu0 %v1183
      %1360 = vmatpush.bf16.msra.mxu0 %v1182
      %1361 = vmatpush.bf16.msra.mxu0 %v1181
      %1362 = vmatpush.bf16.msra.mxu0 %v1180
      %1363 = vmatpush.bf16.msra.mxu0 %v1179
      %1364 = vmatpush.bf16.msra.mxu0 %v1178
      %1365 = vmatpush.bf16.msra.mxu0 %v1177
      %1366 = vmatpush.bf16.msra.mxu0 %v1176
      %1367 = vmatmul.bf16.gmra.mxu0 %v741
      %v1368 = vpop.f32.mrf.mxu0
      %v1369 = vadd.f32 %v1350, %v1368
      %v1370 = vpop.f32.mrf.mxu0
      %v1371 = vadd.f32 %v1352, %v1370
      %1372 = vmatmul.bf16.gmra.mxu0 %v749
      %v1373 = vpop.f32.mrf.mxu0
      %v1374 = vadd.f32 %v1355, %v1373
      %v1375 = vpop.f32.mrf.mxu0
      %v1376 = vadd.f32 %v1357, %v1375
      %1377 = vdwg.mxu0
      %1378 = vmatpush.bf16.msra.mxu0 %v1191
      %1379 = vmatpush.bf16.msra.mxu0 %v1190
      %1380 = vmatpush.bf16.msra.mxu0 %v1189
      %1381 = vmatpush.bf16.msra.mxu0 %v1188
      %1382 = vmatpush.bf16.msra.mxu0 %v1187
      %1383 = vmatpush.bf16.msra.mxu0 %v1186
      %1384 = vmatpush.bf16.msra.mxu0 %v1185
      %1385 = vmatpush.bf16.msra.mxu0 %v1184
      %1386 = vmatmul.bf16.gmra.mxu0 %v742
      %v1387 = vpop.f32.mrf.mxu0
      %v1388 = vadd.f32 %v1369, %v1387
      %v1389 = vpop.f32.mrf.mxu0
      %v1390 = vadd.f32 %v1371, %v1389
      %1391 = vmatmul.bf16.gmra.mxu0 %v750
      %v1392 = vpop.f32.mrf.mxu0
      %v1393 = vadd.f32 %v1374, %v1392
      %v1394 = vpop.f32.mrf.mxu0
      %v1395 = vadd.f32 %v1376, %v1394
      %1396 = vdwg.mxu0
      %1397 = vmatpush.bf16.msra.mxu0 %v1199
      %1398 = vmatpush.bf16.msra.mxu0 %v1198
      %1399 = vmatpush.bf16.msra.mxu0 %v1197
      %1400 = vmatpush.bf16.msra.mxu0 %v1196
      %1401 = vmatpush.bf16.msra.mxu0 %v1195
      %1402 = vmatpush.bf16.msra.mxu0 %v1194
      %1403 = vmatpush.bf16.msra.mxu0 %v1193
      %1404 = vmatpush.bf16.msra.mxu0 %v1192
      %1405 = vmatmul.bf16.gmra.mxu0 %v743
      %v1406 = vpop.f32.mrf.mxu0
      %v1407 = vadd.f32 %v1388, %v1406
      %v1408 = vpop.f32.mrf.mxu0
      %v1409 = vadd.f32 %v1390, %v1408
      %1410 = vmatmul.bf16.gmra.mxu0 %v751
      %v1411 = vpop.f32.mrf.mxu0
      %v1412 = vadd.f32 %v1393, %v1411
      %v1413 = vpop.f32.mrf.mxu0
      %v1414 = vadd.f32 %v1395, %v1413
      %1415 = vdwg.mxu0
      %v1416 = vpack.c.bf16 %v1409, %v1407
      %v1417 = vpack.c.bf16 %v1414, %v1412
      %v1418 = vld [vmem:[%s415] sm:$0x1]
      %v1420 = vperm.slane %v1418, 0
      %1422 = vmatpush.bf16.msra.mxu0 0
      %1423 = vmatpush.bf16.msra.mxu0 0
      %1424 = vmatpush.bf16.msra.mxu0 0
      %1425 = vmatpush.bf16.msra.mxu0 0
      %1426 = vmatpush.bf16.msra.mxu0 0
      %1427 = vmatpush.bf16.msra.mxu0 0
      %1428 = vmatpush.bf16.msra.mxu0 %v1417
      %1429 = vmatpush.bf16.msra.mxu0 %v1416
      %1430 = vmatmul.bf16.gmra.mxu0 %v547
      %v1431 = vpop.f32.mrf.mxu0
      %v1432 = vadd.f32 %v1420, %v1431
      %v1433 = vpop.f32.mrf.mxu0
      %v1434 = vadd.f32 %v1420, %v1433
      %1435 = vmatmul.bf16.gmra.mxu0 %v550
      %v1436 = vpop.f32.mrf.mxu0
      %v1437 = vadd.f32 %v1420, %v1436
      %v1438 = vpop.f32.mrf.mxu0
      %v1439 = vadd.f32 %v1420, %v1438
      %1440 = vdwg.mxu0
      %v1441 = vpack.c.bf16 %v1432, %v1432
      %v1442 = vpack.c.bf16 %v1434, %v1434
      %v1443 = vpack.c.bf16 %v1437, %v1437
      %v1444 = vpack.c.bf16 %v1439, %v1439
      %s1445 = smul.u32 %s21, 32
      %s1446 = sshra.s32 %s1445, 3
      %s1447 = sand.u32 %s1445, 7
      %s1448 = smul.addr %s1446, 4
      %s1449 = scalar_lea.vmem [#allocation2], %s1448
      %1450 = vst [vmem:[%s1449] sm:$0xf] %v1441
      %1451 = vst [vmem:[%s1449 + $0x4] sm:$0xf] %v1442
      %1452 = vst [vmem:[%s1449 + $0x8] sm:$0xf] %v1443
      %1453 = vst [vmem:[%s1449 + $0xc] sm:$0xf] %v1444
      %v1454 = vld [vmem:[%s5] sm:$0xf]
      %v1455 = vld [vmem:[%s5 + $0x4] sm:$0xf]
      %v1456 = vld [vmem:[%s5 + $0x8] sm:$0xf]
      %v1457 = vld [vmem:[%s5 + $0xc] sm:$0xf]
      %v1458 = vld [vmem:[%s5 + $0x10] sm:$0xf]
      %v1459 = vld [vmem:[%s5 + $0x14] sm:$0xf]
      %v1460 = vld [vmem:[%s5 + $0x18] sm:$0xf]
      %v1461 = vld [vmem:[%s5 + $0x1c] sm:$0xf]
      %v1462 = vld [vmem:[%s5 + $0x20] sm:$0xf]
      %v1463 = vld [vmem:[%s5 + $0x24] sm:$0xf]
      %v1464 = vld [vmem:[%s5 + $0x28] sm:$0xf]
      %v1465 = vld [vmem:[%s5 + $0x2c] sm:$0xf]
      %v1466 = vld [vmem:[%s5 + $0x30] sm:$0xf]
      %v1467 = vld [vmem:[%s5 + $0x34] sm:$0xf]
      %v1468 = vld [vmem:[%s5 + $0x38] sm:$0xf]
      %v1469 = vld [vmem:[%s5 + $0x3c] sm:$0xf]
      %v1470 = vld [vmem:[%s6] sm:$0x1]
      %v1472 = vperm.slane %v1470, 0
      %v1478 = vunpack.c.l.b16 %v1441
      %v1479 = vunpack.c.l.b16 %v1442
      %v1480 = vunpack.c.l.b16 %v1443
      %v1481 = vunpack.c.l.b16 %v1444
      %v1482 = vpack.c.b16 %v1479, %v1478
      %v1483 = vpack.c.b16 %v1481, %v1480
      %v1502 = vunpack.c.l.b16 %v1454
      %v1503 = vunpack.c.l.b16 %v1455
      %v1504 = vunpack.c.l.b16 %v1456
      %v1505 = vunpack.c.l.b16 %v1457
      %v1506 = vunpack.c.l.b16 %v1458
      %v1507 = vunpack.c.l.b16 %v1459
      %v1508 = vunpack.c.l.b16 %v1460
      %v1509 = vunpack.c.l.b16 %v1461
      %v1510 = vunpack.c.l.b16 %v1462
      %v1511 = vunpack.c.l.b16 %v1463
      %v1512 = vunpack.c.l.b16 %v1464
      %v1513 = vunpack.c.l.b16 %v1465
      %v1514 = vunpack.c.l.b16 %v1466
      %v1515 = vunpack.c.l.b16 %v1467
      %v1516 = vunpack.c.l.b16 %v1468
      %v1517 = vunpack.c.l.b16 %v1469
      %v1518 = vpack.c.b16 %v1503, %v1502
      %v1519 = vpack.c.b16 %v1505, %v1504
      %v1520 = vpack.c.b16 %v1507, %v1506
      %v1521 = vpack.c.b16 %v1509, %v1508
      %v1522 = vpack.c.b16 %v1511, %v1510
      %v1523 = vpack.c.b16 %v1513, %v1512
      %v1524 = vpack.c.b16 %v1515, %v1514
      %v1525 = vpack.c.b16 %v1517, %v1516
      %1534 = vmatpush.bf16.msra.mxu0 %v1525
      %1535 = vmatpush.bf16.msra.mxu0 %v1524
      %1536 = vmatpush.bf16.msra.mxu0 %v1523
      %1537 = vmatpush.bf16.msra.mxu0 %v1522
      %1538 = vmatpush.bf16.msra.mxu0 %v1521
      %1539 = vmatpush.bf16.msra.mxu0 %v1520
      %1540 = vmatpush.bf16.msra.mxu0 %v1519
      %1541 = vmatpush.bf16.msra.mxu0 %v1518
      %1542 = vmatmul.bf16.gmra.mxu0 %v1482
      %v1543 = vpop.f32.mrf.mxu0
      %v1544 = vadd.f32 %v1472, %v1543
      %v1545 = vpop.f32.mrf.mxu0
      %v1546 = vadd.f32 %v1472, %v1545
      %1547 = vmatmul.bf16.gmra.mxu0 %v1483
      %v1548 = vpop.f32.mrf.mxu0
      %v1549 = vadd.f32 %v1472, %v1548
      %v1550 = vpop.f32.mrf.mxu0
      %v1551 = vadd.f32 %v1472, %v1550
      %1552 = vdwg.mxu0
      %v1553 = vtanh.pop %v1544
      %v1554 = vtanh.pop %v1546
      %v1555 = vtanh.pop %v1549
      %v1556 = vtanh.pop %v1551
      %v1557 = vadd.f32 %v1553, %v1554
      %v1558 = vadd.f32 %v1557, %v1555
      %v1559 = vadd.f32 %v1558, %v1556
      %v1560 = vrot.slane %v1559, 4
      %v1561 = vadd.f32 %v1559, %v1560
      %v1562 = vrot.slane %v1561, 2
      %v1563 = vadd.f32 %v1561, %v1562
      %v1564 = vrot.slane %v1563, 1
      %v1565 = vadd.f32 %v1563, %v1564
      %v1566 = vrcp.pop 32.0
      %v1567 = vmul.f32 32.0, %v1566
      %v1568 = vsub.f32 1.0, %v1567
      %v1569 = vmul.f32 %v1566, %v1568
      %v1570 = vadd.f32 %v1566, %v1569
      %vm1571 = vweird.f32 %v1566
      %v1572 = vsel %vm1571, %v1566, %v1570
      %v1573 = vmul.f32 %v1565, %v1572
      %s1574 = smul.u32 %s21, 8
      %s1575 = scalar_lea.vmem [#allocation3], %s1574
      %1576 = vst [vmem:[%s1575] sm:$0xff] %v1573
      %p1577 = scmp.eq.s32.totalorder %s21, 1
      // Predicated region
      $region61: #{gcn_semantic_forward.1} parent=59 // pred_check
        %p1578 = pneg %p1577
      $region62: #{gcn_semantic_forward.1} parent=59 // pred_check_branch
        %1580 = sbr.rel (%p1578) target = $region64
      $region63: #{gcn_semantic_forward.1} parent=59 // pred_region
        %v1581 = vld [vmem:[%s7] sm:$0x1]
        %v1582 = vld [vmem:[#allocation3] sm:$0x1]
        %v1583 = vmul.f32 %v1582, %v1581
        %vm1584 = vcmask 1040384
        %v1585 = vsel %vm1584, %v1583, 0.0
        %1586 = vadd.xlane.f32.xlu0 %v1585
        %v1587 = vpop.xlane.xlu0 %1586
        %v1588 = vrot.slane %v1587, 4
        %v1589 = vadd.f32 %v1587, %v1588
        %v1590 = vrot.slane %v1589, 2
        %v1591 = vadd.f32 %v1589, %v1590
        %v1592 = vrot.slane %v1591, 1
        %v1593 = vadd.f32 %v1591, %v1592
        %s1594 = vtos %v1593
        %v1595 = vld [vmem:[#allocation3 + $0x8] sm:$0x1]
        %v1596 = vmul.f32 %v1595, %v1581
        %v1597 = vsel %vm1584, %v1596, 0.0
        %1598 = vadd.xlane.f32.xlu0 %v1597
        %v1599 = vpop.xlane.xlu0 %1598
        %v1600 = vrot.slane %v1599, 4
        %v1601 = vadd.f32 %v1599, %v1600
        %v1602 = vrot.slane %v1601, 2
        %v1603 = vadd.f32 %v1601, %v1602
        %v1604 = vrot.slane %v1603, 1
        %v1605 = vadd.f32 %v1603, %v1604
        %s1606 = vtos %v1605
        %s1607 = smax.f32 %s1594, %s1606
        %s1608 = ssub.f32 %s1594, %s1607
        %v1609 = vstv %s1608
        %v1610 = vmul.f32 %v1609, 1.442695
        %v1611 = vpow.pop %v1610
        %s1612 = vtos %v1611
        %s1613 = ssub.f32 %s1606, %s1607
        %v1614 = vstv %s1613
        %v1615 = vmul.f32 %v1614, 1.442695
        %v1616 = vpow.pop %v1615
        %s1617 = vtos %v1616
        %s1618 = sadd.f32 %s1612, %s1617
        %v1619 = vstv %s1618
        %v1620 = vrcp.pop %v1619
        %v1621 = vmul.f32 %v1619, %v1620
        %v1622 = vsub.f32 1.0, %v1621
        %v1623 = vmul.f32 %v1620, %v1622
        %v1624 = vadd.f32 %v1620, %v1623
        %vm1625 = vweird.f32 %v1619
        %vm1626 = vweird.f32 %v1620
        %vm1627 = vmor %vm1625, %vm1626
        %v1628 = vsel %vm1627, %v1620, %v1624
        %v1629 = vand.u32 2147483647, %v1619
        %vm1630 = vcmp.eq.f32.partialorder %v1629, 8.507059e+37
        %v1631 = vand.u32 %v1619, 2147483648
        %v1632 = vor.u32 1.1754944e-38, %v1631
        %v1633 = vsel %vm1630, %v1632, %v1628
        %s1634 = vtos %v1633
        %s1635 = smul.f32 %s1612, %s1634
        %v1636 = vld [vmem:[#allocation2] sm:$0xf]
        %v1637 = vld [vmem:[#allocation2 + $0x4] sm:$0xf]
        %v1638 = vld [vmem:[#allocation2 + $0x8] sm:$0xf]
        %v1639 = vld [vmem:[#allocation2 + $0xc] sm:$0xf]
        %v1640 = vunpack.c.l.bf16 %v1636
        %v1641 = vunpack.c.l.bf16 %v1637
        %v1642 = vunpack.c.l.bf16 %v1638
        %v1643 = vunpack.c.l.bf16 %v1639
        %v1644 = vstv %s1635
        %v1645 = vmul.f32 %v1644, %v1640
        %v1646 = vmul.f32 %v1644, %v1641
        %v1647 = vmul.f32 %v1644, %v1642
        %v1648 = vmul.f32 %v1644, %v1643
        %s1649 = smul.f32 %s1617, %s1634
        %v1650 = vld [vmem:[#allocation2 + $0x10] sm:$0xf]
        %v1651 = vld [vmem:[#allocation2 + $0x14] sm:$0xf]
        %v1652 = vld [vmem:[#allocation2 + $0x18] sm:$0xf]
        %v1653 = vld [vmem:[#allocation2 + $0x1c] sm:$0xf]
        %v1654 = vunpack.c.l.bf16 %v1650
        %v1655 = vunpack.c.l.bf16 %v1651
        %v1656 = vunpack.c.l.bf16 %v1652
        %v1657 = vunpack.c.l.bf16 %v1653
        %v1658 = vstv %s1649
        %v1659 = vmul.f32 %v1658, %v1654
        %v1660 = vmul.f32 %v1658, %v1655
        %v1661 = vmul.f32 %v1658, %v1656
        %v1662 = vmul.f32 %v1658, %v1657
        %v1663 = vadd.f32 %v1645, %v1659
        %v1664 = vadd.f32 %v1646, %v1660
        %v1665 = vadd.f32 %v1647, %v1661
        %v1666 = vadd.f32 %v1648, %v1662
        %v1667 = vpack.c.bf16 %v1664, %v1663
        %v1668 = vpack.c.bf16 %v1666, %v1665
        %v1669 = vld [vmem:[%s8] sm:$0xf]
        %v1670 = vld [vmem:[%s8 + $0x4] sm:$0xf]
        %v1671 = vld [vmem:[%s8 + $0x8] sm:$0xf]
        %v1672 = vld [vmem:[%s8 + $0xc] sm:$0xf]
        %v1673 = vld [vmem:[%s8 + $0x10] sm:$0xf]
        %v1674 = vld [vmem:[%s8 + $0x14] sm:$0xf]
        %v1675 = vld [vmem:[%s8 + $0x18] sm:$0xf]
        %v1676 = vld [vmem:[%s8 + $0x1c] sm:$0xf]
        %v1677 = vld [vmem:[%s8 + $0x20] sm:$0xf]
        %v1678 = vld [vmem:[%s8 + $0x24] sm:$0xf]
        %v1679 = vld [vmem:[%s8 + $0x28] sm:$0xf]
        %v1680 = vld [vmem:[%s8 + $0x2c] sm:$0xf]
        %v1681 = vld [vmem:[%s8 + $0x30] sm:$0xf]
        %v1682 = vld [vmem:[%s8 + $0x34] sm:$0xf]
        %v1683 = vld [vmem:[%s8 + $0x38] sm:$0xf]
        %v1684 = vld [vmem:[%s8 + $0x3c] sm:$0xf]
        %v1685 = vld [vmem:[%s9] sm:$0x1]
        %v1687 = vperm.slane %v1685, 0
        %v1705 = vunpack.c.l.b16 %v1669
        %v1706 = vunpack.c.l.b16 %v1670
        %v1707 = vunpack.c.l.b16 %v1671
        %v1708 = vunpack.c.l.b16 %v1672
        %v1709 = vunpack.c.l.b16 %v1673
        %v1710 = vunpack.c.l.b16 %v1674
        %v1711 = vunpack.c.l.b16 %v1675
        %v1712 = vunpack.c.l.b16 %v1676
        %v1713 = vunpack.c.l.b16 %v1677
        %v1714 = vunpack.c.l.b16 %v1678
        %v1715 = vunpack.c.l.b16 %v1679
        %v1716 = vunpack.c.l.b16 %v1680
        %v1717 = vunpack.c.l.b16 %v1681
        %v1718 = vunpack.c.l.b16 %v1682
        %v1719 = vunpack.c.l.b16 %v1683
        %v1720 = vunpack.c.l.b16 %v1684
        %v1721 = vpack.c.b16 %v1706, %v1705
        %v1722 = vpack.c.b16 %v1708, %v1707
        %v1723 = vpack.c.b16 %v1710, %v1709
        %v1724 = vpack.c.b16 %v1712, %v1711
        %v1725 = vpack.c.b16 %v1714, %v1713
        %v1726 = vpack.c.b16 %v1716, %v1715
        %v1727 = vpack.c.b16 %v1718, %v1717
        %v1728 = vpack.c.b16 %v1720, %v1719
        %1737 = vmatpush.bf16.msra.mxu0 %v1728
        %1738 = vmatpush.bf16.msra.mxu0 %v1727
        %1739 = vmatpush.bf16.msra.mxu0 %v1726
        %1740 = vmatpush.bf16.msra.mxu0 %v1725
        %1741 = vmatpush.bf16.msra.mxu0 %v1724
        %1742 = vmatpush.bf16.msra.mxu0 %v1723
        %1743 = vmatpush.bf16.msra.mxu0 %v1722
        %1744 = vmatpush.bf16.msra.mxu0 %v1721
        %1745 = vmatmul.bf16.gmra.mxu0 %v1667
        %v1746 = vpop.f32.mrf.mxu0
        %v1747 = vadd.f32 %v1687, %v1746
        %v1748 = vpop.f32.mrf.mxu0
        %v1749 = vadd.f32 %v1687, %v1748
        %1750 = vmatmul.bf16.gmra.mxu0 %v1668
        %v1751 = vpop.f32.mrf.mxu0
        %v1752 = vadd.f32 %v1687, %v1751
        %v1753 = vpop.f32.mrf.mxu0
        %v1754 = vadd.f32 %v1687, %v1753
        %1755 = vdwg.mxu0
        %1756 = vst [vmem:[%s10] sm:$0xff] %v1747
        %1757 = vst [vmem:[%s10 + $0x8] sm:$0xff] %v1749
        %1758 = vst [vmem:[%s10 + $0x10] sm:$0xff] %v1752
        %1759 = vst [vmem:[%s10 + $0x18] sm:$0xff] %v1754
      $region64: #{gcn_semantic_forward.1} parent=59 // pred_fallthru
        _
      // Predicated region
      $region65: #{gcn_semantic_forward.1} parent=59 // pred_check
        %p1760 = pneg %p269
      $region66: #{gcn_semantic_forward.1} parent=59 // pred_check_branch
        %1762 = sbr.rel (%p1760) target = $region68
      $region67: #{gcn_semantic_forward.1} parent=59 // pred_region
        _
      $region68: #{gcn_semantic_forward.1} parent=59 // pred_fallthru
        _
      // Predicated region
      $region69: #{gcn_semantic_forward.1} parent=59 // pred_check
        %p1763 = pneg %p269
      $region70: #{gcn_semantic_forward.1} parent=59 // pred_check_branch
        %1765 = sbr.rel (%p1763) target = $region72
      $region71: #{gcn_semantic_forward.1} parent=59 // pred_region
        _
      $region72: #{gcn_semantic_forward.1} parent=59 // pred_fallthru
        _
    $region60: #{gcn_semantic_forward.1} parent=5 // pred_fallthru
      _
    %p1766 = scmp.le.s32.totalorder 2, %s16
    // Predicated region
    $region73: #{gcn_semantic_forward.1} parent=5 // pred_check
      %p1767 = pneg %p1766
    $region74: #{gcn_semantic_forward.1} parent=5 // pred_check_branch
      %1769 = sbr.rel (%p1767) target = $region76
    $region75: #{gcn_semantic_forward.1} parent=5 // pred_region
      %s1770 = ssub.s32 %s16, 2
    $region76: #{gcn_semantic_forward.1} parent=5 // pred_fallthru
      _
  $region6: #{gcn_semantic_forward.1} parent=0 // loop_footer
    %s20 = sadd.s32 1, %s16
  $region7: #{gcn_semantic_forward.1} parent=0 // loop_footer_branch
    %15 = sbr.rel target = $region3
  $region8: #{gcn_semantic_forward.1} parent=0 // loop_exit
    _

</llo_original>
